<compile_context>
chip_gen: v6e
topology: v6e:2x2x1
jax: 0.10.0
libtpu: 0.0.40
codegen_flags: <defaults>
</compile_context>

<pallas_src>
import functools

import jax
import jax.numpy as jnp
from jax.experimental import pallas as pl
from jax.experimental.pallas import tpu as pltpu


# ------------------------------------------------------------------
# Kernel
#   grid = (G, N // tile_n): groups parallel, token tiles arbitrary (loss reduction).
# ------------------------------------------------------------------
def grvq_kernel(x_ref, win_ref, bin_ref, cbf_ref, cbb_ref, csq_ref, wout_ref, bout_ref,
                q_ref, idx_ref, loss_ref, *, num_quantizers, inv_count):
    n = pl.program_id(1)

    @pl.when(n == 0)
    def _init_loss():
        loss_ref[...] = jnp.zeros_like(loss_ref)

    x = x_ref[...]                                                   # (tN, dg) f32
    # ResidualVQ.project_in
    h = jnp.dot(x.astype(jnp.bfloat16), win_ref[0],
                preferred_element_type=jnp.float32) + bin_ref[0]     # (tN, cd) f32
    tN = h.shape[0]

    csq_all = csq_ref[0]                                             # (Q, K) f32, resident

    residual = h
    quant_sum = jnp.zeros_like(h)
    idx_cols = []
    loss_cols = []
    for qi in range(num_quantizers):
        cb_b = cbb_ref[0, qi]                                        # (K, cd) bf16
        cb_f = cbf_ref[0, qi]                                        # (K, cd) f32
        K = cb_b.shape[0]

        # nearest code: argmin ||r - c||^2 == argmin (|c|^2 - 2 r.c)   (r-norm dropped)
        dots = jax.lax.dot_general(residual.astype(jnp.bfloat16), cb_b,
                                   (((1,), (1,)), ((), ())),
                                   preferred_element_type=jnp.float32)        # (tN, K)
        dist = csq_all[qi:qi + 1, :] - 2.0 * dots
        idx = jnp.argmin(dist, axis=-1).astype(jnp.int32)                     # (tN,)

        # exact f32 codebook-row gather via one-hot matmul
        onehot = (jax.lax.broadcasted_iota(jnp.int32, (tN, K), 1)
                  == idx[:, None]).astype(jnp.float32)
        quant = jnp.dot(onehot, cb_f, preferred_element_type=jnp.float32)     # (tN, cd) f32

        # commitment loss = mse(quantize.detach(), residual); straight-through forward.
        diff = quant - residual
        sq = jnp.sum(diff * diff, axis=1, keepdims=True)                      # (tN, 1)
        loss_cols.append(jnp.sum(sq, axis=0, keepdims=True))                  # (1, 1)
        idx_cols.append(idx[:, None])

        residual = residual - quant
        quant_sum = quant_sum + quant

    idx_ref[0] = jnp.concatenate(idx_cols, axis=-1)                           # (tN, Q)
    loss_ref[...] = loss_ref[...] + jnp.concatenate(loss_cols, axis=-1).reshape(
        1, 1, num_quantizers)

    @pl.when(n == pl.num_programs(1) - 1)
    def _finalize_loss():
        loss_ref[...] = loss_ref[...] * inv_count

    # ResidualVQ.project_out (written straight into the per-group column block of (N, D))
    q_ref[...] = jnp.dot(quant_sum.astype(jnp.bfloat16), wout_ref[0],
                         preferred_element_type=jnp.float32) + bout_ref[0]


def _pick_tile_n(n):
    for t in (512, 256, 128, 64, 32, 16, 8):
        if n % t == 0:
            return t
    return n


# ------------------------------------------------------------------
# GRVQ.forward: q, indices, commit_losses = GroupedResidualVQ(x)
# ------------------------------------------------------------------
def grvq_forward(x, p):
    B, T, D = x.shape
    G, dg, cd = p['win'].shape
    Q, K = p['codebooks'].shape[1], p['codebooks'].shape[2]
    assert D == G * dg
    # TODO(synk): non-lane-aligned per-group widths would need in-kernel dynamic slicing.
    assert dg == D or dg % 128 == 0, "per-group feature width must be lane-aligned"

    N = B * T
    tile_n = _pick_tile_n(N)
    n_tiles = N // tile_n

    x2 = x.reshape(N, D)
    win = p['win'].astype(jnp.bfloat16)
    wout = p['wout'].astype(jnp.bfloat16)
    cb_f32 = p['codebooks']
    cb_bf16 = cb_f32.astype(jnp.bfloat16)
    c_sq = jnp.sum(cb_f32 * cb_f32, axis=-1)                          # (G, Q, K)

    in_specs = [
        pl.BlockSpec((tile_n, dg), lambda g, n: (n, g)),              # x group/token chunk
        pl.BlockSpec((1, dg, cd), lambda g, n: (g, 0, 0)),            # project_in weight
        pl.BlockSpec((1, 1, cd), lambda g, n: (g, 0, 0)),             # project_in bias
        pl.BlockSpec((1, Q, K, cd), lambda g, n: (g, 0, 0, 0)),       # codebooks f32
        pl.BlockSpec((1, Q, K, cd), lambda g, n: (g, 0, 0, 0)),       # codebooks bf16
        pl.BlockSpec((1, Q, K), lambda g, n: (g, 0, 0)),              # codebook |c|^2
        pl.BlockSpec((1, cd, dg), lambda g, n: (g, 0, 0)),            # project_out weight
        pl.BlockSpec((1, 1, dg), lambda g, n: (g, 0, 0)),             # project_out bias
    ]
    out_specs = (
        pl.BlockSpec((tile_n, dg), lambda g, n: (n, g)),              # quantized (N, D) layout
        pl.BlockSpec((1, tile_n, Q), lambda g, n: (g, n, 0)),         # indices (G, N, Q)
        pl.BlockSpec((1, 1, Q), lambda g, n: (g, 0, 0)),              # commit losses (G, 1, Q)
    )
    out_shapes = (
        jax.ShapeDtypeStruct((N, D), jnp.float32),
        jax.ShapeDtypeStruct((G, N, Q), jnp.int32),
        jax.ShapeDtypeStruct((G, 1, Q), jnp.float32),
    )

    cost = pl.CostEstimate(
        flops=int(G * N * (4 * dg * cd + Q * 4 * K * cd)),
        transcendentals=0,
        bytes_accessed=int(8 * N * D + 4 * G * N * Q
                           + 6 * G * dg * cd * 2 + 6 * G * Q * K * cd
                           + 4 * G * Q * K + 4 * G * (cd + dg)),
    )

    q2, idx, loss = pl.pallas_call(
        functools.partial(grvq_kernel, num_quantizers=Q,
                          inv_count=1.0 / float(N * cd)),
        grid=(G, n_tiles),
        in_specs=in_specs,
        out_specs=out_specs,
        out_shape=out_shapes,
        compiler_params=pltpu.CompilerParams(
            dimension_semantics=("parallel", "arbitrary")),
        cost_estimate=cost,
    )(x2, win, p['bin'], cb_f32, cb_bf16, c_sq, wout, p['bout'])

    q = q2.reshape(B, T, D)
    indices = idx.reshape(G, B, T, Q)
    commit_losses = loss.reshape(G, Q)
    return q, indices, commit_losses


# ------------------------------------------------------------------
# Deterministic synthetic parameter init
# ------------------------------------------------------------------
def init_grvq_params(key, dim, groups, num_quantizers, codebook_size, codebook_dim):
    dg = dim // groups
    ks = jax.random.split(key, 5)
    s = 0.05
    return {
        'win': jax.random.normal(ks[0], (groups, dg, codebook_dim), jnp.float32) * s,
        'bin': jax.random.normal(ks[1], (groups, 1, codebook_dim), jnp.float32) * s,
        'codebooks': jax.random.normal(
            ks[2], (groups, num_quantizers, codebook_size, codebook_dim), jnp.float32),
        'wout': jax.random.normal(ks[3], (groups, codebook_dim, dg), jnp.float32) * s,
        'bout': jax.random.normal(ks[4], (groups, 1, dg), jnp.float32) * s,
    }


if __name__ == "__main__":
    # GroupedResidualVQ(dim=1280, ...); small batch/sequence and VQ config.
    B, T = 2, 16
    D = 1280                      # hard-coded dim in the torch module
    G, Q, K, CD = 2, 2, 64, 16    # groups, num_quantizers, codebook_size, codebook_dim

    key = jax.random.PRNGKey(0)
    k_x, k_p = jax.random.split(key)
    params = init_grvq_params(k_p, D, G, Q, K, CD)
    x = jax.random.normal(k_x, (B, T, D), jnp.float32)

    fwd = jax.jit(grvq_forward)
    q, c, commit = jax.block_until_ready(fwd(x, params))

    assert q.shape == (B, T, D) and q.dtype == jnp.float32
    assert c.shape == (G, B, T, Q) and c.dtype == jnp.int32
    assert commit.shape == (G, Q) and commit.dtype == jnp.float32
    print("KERNEL_OK")
</pallas_src>

<mosaic_0001>
module attributes {stable_mosaic.version = 11 : i64} {
  func.func @grvq_kernel(%arg0: i32, %arg1: i32, %arg2: memref<32x640xf32, #tpu.memory_space<vmem>>, %arg3: memref<1x640x16xbf16, #tpu.memory_space<vmem>>, %arg4: memref<1x1x16xf32, #tpu.memory_space<vmem>>, %arg5: memref<1x2x64x16xf32, #tpu.memory_space<vmem>>, %arg6: memref<1x2x64x16xbf16, #tpu.memory_space<vmem>>, %arg7: memref<1x2x64xf32, #tpu.memory_space<vmem>>, %arg8: memref<1x16x640xbf16, #tpu.memory_space<vmem>>, %arg9: memref<1x1x640xf32, #tpu.memory_space<vmem>>, %arg10: memref<32x640xf32, #tpu.memory_space<vmem>>, %arg11: memref<1x32x2xi32, #tpu.memory_space<vmem>>, %arg12: memref<1x1x2xf32, #tpu.memory_space<vmem>>) attributes {dimension_semantics = [#tpu.dimension_semantics<parallel>, #tpu.dimension_semantics<arbitrary>], iteration_bounds = array<i64: 2, 1>, scalar_prefetch = 0 : i64, scratch_operands = 0 : i64, tpu.core_type = #tpu.core_type<tc>, window_params = [{transform_indices = @transform_0, window_bounds = array<i64: 32, 640>}, {transform_indices = @transform_1, window_bounds = array<i64: 1, 640, 16>}, {transform_indices = @transform_2, window_bounds = array<i64: 1, 1, 16>}, {transform_indices = @transform_3, window_bounds = array<i64: 1, 2, 64, 16>}, {transform_indices = @transform_4, window_bounds = array<i64: 1, 2, 64, 16>}, {transform_indices = @transform_5, window_bounds = array<i64: 1, 2, 64>}, {transform_indices = @transform_6, window_bounds = array<i64: 1, 16, 640>}, {transform_indices = @transform_7, window_bounds = array<i64: 1, 1, 640>}, {transform_indices = @transform_8, window_bounds = array<i64: 32, 640>}, {transform_indices = @transform_9, window_bounds = array<i64: 1, 32, 2>}, {transform_indices = @transform_10, window_bounds = array<i64: 1, 1, 2>}]} {
    %c0_i32 = arith.constant 0 : i32
    %0 = arith.cmpi eq, %arg1, %c0_i32 : i32
    %1 = arith.extui %0 : i1 to i32
    %c0_i32_0 = arith.constant 0 : i32
    %2 = arith.cmpi ne, %1, %c0_i32_0 : i32
    scf.if %2 {
      %cst_57 = arith.constant 0.000000e+00 : f32
      %91 = vector.broadcast %cst_57 : f32 to vector<1x1x2xf32>
      %c0_58 = arith.constant 0 : index
      %c0_59 = arith.constant 0 : index
      %c0_60 = arith.constant 0 : index
      %92 = vector.load %arg12[%c0_58, %c0_59, %c0_60] : memref<1x1x2xf32, #tpu.memory_space<vmem>>, vector<1x1x2xf32>
      tpu.vector_store %arg12[%c0_58, %c0_59, %c0_60], %91 {strides = array<i32>} : memref<1x1x2xf32, #tpu.memory_space<vmem>>, vector<1x1x2xf32>,
    } else {
    }
    %c0 = arith.constant 0 : index
    %c0_1 = arith.constant 0 : index
    %3 = vector.load %arg2[%c0, %c0_1] : memref<32x640xf32, #tpu.memory_space<vmem>>, vector<32x640xf32>
    %4 = arith.truncf %3 : vector<32x640xf32> to vector<32x640xbf16>
    %c0_2 = arith.constant 0 : index
    %c0_3 = arith.constant 0 : index
    %c0_4 = arith.constant 0 : index
    %5 = vector.load %arg3[%c0_2, %c0_3, %c0_4] : memref<1x640x16xbf16, #tpu.memory_space<vmem>>, vector<1x640x16xbf16>
    %6 = vector.shape_cast %5 : vector<1x640x16xbf16> to vector<640x16xbf16>
    %cst = arith.constant dense<0.000000e+00> : vector<32x16xf32>
    %7 = tpu.matmul %4, %6, %cst {dimension_numbers = #tpu.dot_dimension_numbers<[1], [0], [0], [1], [0, 0, 1, 1], [], []>} : vector<32x640xbf16>, vector<640x16xbf16>, vector<32x16xf32> -> vector<32x16xf32>
    %c0_5 = arith.constant 0 : index
    %c0_6 = arith.constant 0 : index
    %c0_7 = arith.constant 0 : index
    %8 = vector.load %arg4[%c0_5, %c0_6, %c0_7] : memref<1x1x16xf32, #tpu.memory_space<vmem>>, vector<1x1x16xf32>
    %9 = vector.shape_cast %8 : vector<1x1x16xf32> to vector<1x16xf32>
    %10 = vector.broadcast %9 : vector<1x16xf32> to vector<32x16xf32>
    %11 = arith.addf %7, %10 : vector<32x16xf32>
    %c0_8 = arith.constant 0 : index
    %c0_9 = arith.constant 0 : index
    %c0_10 = arith.constant 0 : index
    %12 = vector.load %arg7[%c0_8, %c0_9, %c0_10] : memref<1x2x64xf32, #tpu.memory_space<vmem>>, vector<1x2x64xf32>
    %13 = vector.shape_cast %12 : vector<1x2x64xf32> to vector<2x64xf32>
    %cst_11 = arith.constant 0.000000e+00 : f32
    %14 = vector.broadcast %cst_11 : f32 to vector<32x16xf32>
    %c0_12 = arith.constant 0 : index
    %c0_13 = arith.constant 0 : index
    %c0_14 = arith.constant 0 : index
    %c0_15 = arith.constant 0 : index
    %15 = vector.load %arg6[%c0_12, %c0_13, %c0_14, %c0_15] : memref<1x2x64x16xbf16, #tpu.memory_space<vmem>>, vector<1x1x64x16xbf16>
    %16 = vector.shape_cast %15 : vector<1x1x64x16xbf16> to vector<64x16xbf16>
    %c0_16 = arith.constant 0 : index
    %c0_17 = arith.constant 0 : index
    %c0_18 = arith.constant 0 : index
    %c0_19 = arith.constant 0 : index
    %17 = vector.load %arg5[%c0_16, %c0_17, %c0_18, %c0_19] : memref<1x2x64x16xf32, #tpu.memory_space<vmem>>, vector<1x1x64x16xf32>
    %18 = vector.shape_cast %17 : vector<1x1x64x16xf32> to vector<64x16xf32>
    %19 = arith.truncf %11 : vector<32x16xf32> to vector<32x16xbf16>
    %cst_20 = arith.constant dense<0.000000e+00> : vector<32x64xf32>
    %20 = tpu.matmul %19, %16, %cst_20 {dimension_numbers = #tpu.dot_dimension_numbers<[1], [1], [0], [0], [0, 0, 1, 0], [], []>} : vector<32x16xbf16>, vector<64x16xbf16>, vector<32x64xf32> -> vector<32x64xf32>
    %21 = vector.extract_strided_slice %13 {offsets = [0, 0], sizes = [1, 64], strides = [1, 1]} : vector<2x64xf32> to vector<1x64xf32>
    %cst_21 = arith.constant 2.000000e+00 : f32
    %22 = vector.broadcast %cst_21 : f32 to vector<32x64xf32>
    %23 = arith.mulf %22, %20 : vector<32x64xf32>
    %24 = vector.broadcast %21 : vector<1x64xf32> to vector<32x64xf32>
    %25 = arith.subf %24, %23 : vector<32x64xf32>
    %26 = tpu.reduce_index %25 {axis = 1 : i32, kind = #tpu.reduction_kind<arg_min>} : vector<32x64xf32> -> vector<32xi32>
    %27 = tpu.iota {dimensions = array<i32: 1>} : vector<32x64xi32>
    %28 = vector.shape_cast %26 : vector<32xi32> to vector<32x1xi32>
    %29 = vector.broadcast %28 : vector<32x1xi32> to vector<32x64xi32>
    %30 = arith.cmpi eq, %27, %29 : vector<32x64xi32>
    %31 = arith.extui %30 : vector<32x64xi1> to vector<32x64xi32>
    %32 = arith.sitofp %31 : vector<32x64xi32> to vector<32x64xf32>
    %cst_22 = arith.constant dense<0.000000e+00> : vector<32x16xf32>
    %33 = tpu.matmul %32, %18, %cst_22 {dimension_numbers = #tpu.dot_dimension_numbers<[1], [0], [0], [1], [0, 0, 1, 1], [], []>} : vector<32x64xf32>, vector<64x16xf32>, vector<32x16xf32> -> vector<32x16xf32>
    %34 = arith.subf %33, %11 : vector<32x16xf32>
    %35 = arith.mulf %34, %34 : vector<32x16xf32>
    %cst_23 = arith.constant dense<0.000000e+00> : vector<32xf32>
    %36 = vector.multi_reduction <add>, %35, %cst_23 [1] : vector<32x16xf32> to vector<32xf32>
    %37 = vector.shape_cast %36 : vector<32xf32> to vector<32x1xf32>
    %cst_24 = arith.constant dense<0.000000e+00> : vector<1xf32>
    %38 = vector.multi_reduction <add>, %37, %cst_24 [0] : vector<32x1xf32> to vector<1xf32>
    %39 = vector.shape_cast %38 : vector<1xf32> to vector<1x1xf32>
    %40 = vector.shape_cast %26 : vector<32xi32> to vector<32x1xi32>
    %41 = arith.subf %11, %33 : vector<32x16xf32>
    %42 = arith.addf %14, %33 : vector<32x16xf32>
    %c0_25 = arith.constant 0 : index
    %c1 = arith.constant 1 : index
    %c0_26 = arith.constant 0 : index
    %c0_27 = arith.constant 0 : index
    %43 = vector.load %arg6[%c0_25, %c1, %c0_26, %c0_27] : memref<1x2x64x16xbf16, #tpu.memory_space<vmem>>, vector<1x1x64x16xbf16>
    %44 = vector.shape_cast %43 : vector<1x1x64x16xbf16> to vector<64x16xbf16>
    %c0_28 = arith.constant 0 : index
    %c1_29 = arith.constant 1 : index
    %c0_30 = arith.constant 0 : index
    %c0_31 = arith.constant 0 : index
    %45 = vector.load %arg5[%c0_28, %c1_29, %c0_30, %c0_31] : memref<1x2x64x16xf32, #tpu.memory_space<vmem>>, vector<1x1x64x16xf32>
    %46 = vector.shape_cast %45 : vector<1x1x64x16xf32> to vector<64x16xf32>
    %47 = arith.truncf %41 : vector<32x16xf32> to vector<32x16xbf16>
    %cst_32 = arith.constant dense<0.000000e+00> : vector<32x64xf32>
    %48 = tpu.matmul %47, %44, %cst_32 {dimension_numbers = #tpu.dot_dimension_numbers<[1], [1], [0], [0], [0, 0, 1, 0], [], []>} : vector<32x16xbf16>, vector<64x16xbf16>, vector<32x64xf32> -> vector<32x64xf32>
    %49 = vector.extract_strided_slice %13 {offsets = [1, 0], sizes = [1, 64], strides = [1, 1]} : vector<2x64xf32> to vector<1x64xf32>
    %cst_33 = arith.constant 2.000000e+00 : f32
    %50 = vector.broadcast %cst_33 : f32 to vector<32x64xf32>
    %51 = arith.mulf %50, %48 : vector<32x64xf32>
    %52 = vector.broadcast %49 : vector<1x64xf32> to vector<32x64xf32>
    %53 = arith.subf %52, %51 : vector<32x64xf32>
    %54 = tpu.reduce_index %53 {axis = 1 : i32, kind = #tpu.reduction_kind<arg_min>} : vector<32x64xf32> -> vector<32xi32>
    %55 = tpu.iota {dimensions = array<i32: 1>} : vector<32x64xi32>
    %56 = vector.shape_cast %54 : vector<32xi32> to vector<32x1xi32>
    %57 = vector.broadcast %56 : vector<32x1xi32> to vector<32x64xi32>
    %58 = arith.cmpi eq, %55, %57 : vector<32x64xi32>
    %59 = arith.extui %58 : vector<32x64xi1> to vector<32x64xi32>
    %60 = arith.sitofp %59 : vector<32x64xi32> to vector<32x64xf32>
    %cst_34 = arith.constant dense<0.000000e+00> : vector<32x16xf32>
    %61 = tpu.matmul %60, %46, %cst_34 {dimension_numbers = #tpu.dot_dimension_numbers<[1], [0], [0], [1], [0, 0, 1, 1], [], []>} : vector<32x64xf32>, vector<64x16xf32>, vector<32x16xf32> -> vector<32x16xf32>
    %62 = arith.subf %61, %41 : vector<32x16xf32>
    %63 = arith.mulf %62, %62 : vector<32x16xf32>
    %cst_35 = arith.constant dense<0.000000e+00> : vector<32xf32>
    %64 = vector.multi_reduction <add>, %63, %cst_35 [1] : vector<32x16xf32> to vector<32xf32>
    %65 = vector.shape_cast %64 : vector<32xf32> to vector<32x1xf32>
    %cst_36 = arith.constant dense<0.000000e+00> : vector<1xf32>
    %66 = vector.multi_reduction <add>, %65, %cst_36 [0] : vector<32x1xf32> to vector<1xf32>
    %67 = vector.shape_cast %66 : vector<1xf32> to vector<1x1xf32>
    %68 = vector.shape_cast %54 : vector<32xi32> to vector<32x1xi32>
    %69 = arith.addf %42, %61 : vector<32x16xf32>
    %70 = tpu.concatenate %40, %68 in 1 : vector<32x1xi32>, vector<32x1xi32> -> vector<32x2xi32>
    %c0_37 = arith.constant 0 : index
    %c0_38 = arith.constant 0 : index
    %c0_39 = arith.constant 0 : index
    %71 = vector.load %arg11[%c0_37, %c0_38, %c0_39] : memref<1x32x2xi32, #tpu.memory_space<vmem>>, vector<1x32x2xi32>
    %72 = vector.shape_cast %71 : vector<1x32x2xi32> to vector<32x2xi32>
    %73 = vector.shape_cast %70 : vector<32x2xi32> to vector<1x32x2xi32>
    tpu.vector_store %arg11[%c0_37, %c0_38, %c0_39], %73 {strides = array<i32>} : memref<1x32x2xi32, #tpu.memory_space<vmem>>, vector<1x32x2xi32>,
    %c0_40 = arith.constant 0 : index
    %c0_41 = arith.constant 0 : index
    %c0_42 = arith.constant 0 : index
    %74 = vector.load %arg12[%c0_40, %c0_41, %c0_42] : memref<1x1x2xf32, #tpu.memory_space<vmem>>, vector<1x1x2xf32>
    %75 = tpu.concatenate %39, %67 in 1 : vector<1x1xf32>, vector<1x1xf32> -> vector<1x2xf32>
    %76 = vector.shape_cast %75 : vector<1x2xf32> to vector<1x1x2xf32>
    %77 = arith.addf %74, %76 : vector<1x1x2xf32>
    %c0_43 = arith.constant 0 : index
    %c0_44 = arith.constant 0 : index
    %c0_45 = arith.constant 0 : index
    %78 = vector.load %arg12[%c0_43, %c0_44, %c0_45] : memref<1x1x2xf32, #tpu.memory_space<vmem>>, vector<1x1x2xf32>
    tpu.vector_store %arg12[%c0_43, %c0_44, %c0_45], %77 {strides = array<i32>} : memref<1x1x2xf32, #tpu.memory_space<vmem>>, vector<1x1x2xf32>,
    %c0_i32_46 = arith.constant 0 : i32
    %79 = arith.cmpi eq, %arg1, %c0_i32_46 : i32
    %80 = arith.extui %79 : i1 to i32
    %c0_i32_47 = arith.constant 0 : i32
    %81 = arith.cmpi ne, %80, %c0_i32_47 : i32
    scf.if %81 {
      %c0_57 = arith.constant 0 : index
      %c0_58 = arith.constant 0 : index
      %c0_59 = arith.constant 0 : index
      %91 = vector.load %arg12[%c0_57, %c0_58, %c0_59] : memref<1x1x2xf32, #tpu.memory_space<vmem>>, vector<1x1x2xf32>
      %cst_60 = arith.constant 0.001953125 : f32
      %92 = vector.broadcast %cst_60 : f32 to vector<1x1x2xf32>
      %93 = arith.mulf %91, %92 : vector<1x1x2xf32>
      %c0_61 = arith.constant 0 : index
      %c0_62 = arith.constant 0 : index
      %c0_63 = arith.constant 0 : index
      %94 = vector.load %arg12[%c0_61, %c0_62, %c0_63] : memref<1x1x2xf32, #tpu.memory_space<vmem>>, vector<1x1x2xf32>
      tpu.vector_store %arg12[%c0_61, %c0_62, %c0_63], %93 {strides = array<i32>} : memref<1x1x2xf32, #tpu.memory_space<vmem>>, vector<1x1x2xf32>,
    } else {
    }
    %82 = arith.truncf %69 : vector<32x16xf32> to vector<32x16xbf16>
    %c0_48 = arith.constant 0 : index
    %c0_49 = arith.constant 0 : index
    %c0_50 = arith.constant 0 : index
    %83 = vector.load %arg8[%c0_48, %c0_49, %c0_50] : memref<1x16x640xbf16, #tpu.memory_space<vmem>>, vector<1x16x640xbf16>
    %84 = vector.shape_cast %83 : vector<1x16x640xbf16> to vector<16x640xbf16>
    %cst_51 = arith.constant dense<0.000000e+00> : vector<32x640xf32>
    %85 = tpu.matmul %82, %84, %cst_51 {dimension_numbers = #tpu.dot_dimension_numbers<[1], [0], [0], [1], [0, 0, 1, 1], [], []>} : vector<32x16xbf16>, vector<16x640xbf16>, vector<32x640xf32> -> vector<32x640xf32>
    %c0_52 = arith.constant 0 : index
    %c0_53 = arith.constant 0 : index
    %c0_54 = arith.constant 0 : index
    %86 = vector.load %arg9[%c0_52, %c0_53, %c0_54] : memref<1x1x640xf32, #tpu.memory_space<vmem>>, vector<1x1x640xf32>
    %87 = vector.shape_cast %86 : vector<1x1x640xf32> to vector<1x640xf32>
    %88 = vector.broadcast %87 : vector<1x640xf32> to vector<32x640xf32>
    %89 = arith.addf %85, %88 : vector<32x640xf32>
    %c0_55 = arith.constant 0 : index
    %c0_56 = arith.constant 0 : index
    %90 = vector.load %arg10[%c0_55, %c0_56] : memref<32x640xf32, #tpu.memory_space<vmem>>, vector<32x640xf32>
    tpu.vector_store %arg10[%c0_55, %c0_56], %89 {strides = array<i32>} : memref<32x640xf32, #tpu.memory_space<vmem>>, vector<32x640xf32>,
    return
  }
  func.func @transform_0(%arg0: i32, %arg1: i32) -> (i32, i32) {
    %c0_i32 = arith.constant 0 : i32
    return %arg1, %arg0 : i32, i32
  }
  func.func @transform_1(%arg0: i32, %arg1: i32) -> (i32, i32, i32) {
    %c0_i32 = arith.constant 0 : i32
    %c0_i32_0 = arith.constant 0 : i32
    %c0_i32_1 = arith.constant 0 : i32
    return %arg0, %c0_i32, %c0_i32_0 : i32, i32, i32
  }
  func.func @transform_2(%arg0: i32, %arg1: i32) -> (i32, i32, i32) {
    %c0_i32 = arith.constant 0 : i32
    %c0_i32_0 = arith.constant 0 : i32
    %c0_i32_1 = arith.constant 0 : i32
    return %arg0, %c0_i32, %c0_i32_0 : i32, i32, i32
  }
  func.func @transform_3(%arg0: i32, %arg1: i32) -> (i32, i32, i32, i32) {
    %c0_i32 = arith.constant 0 : i32
    %c0_i32_0 = arith.constant 0 : i32
    %c0_i32_1 = arith.constant 0 : i32
    %c0_i32_2 = arith.constant 0 : i32
    return %arg0, %c0_i32, %c0_i32_0, %c0_i32_1 : i32, i32, i32, i32
  }
  func.func @transform_4(%arg0: i32, %arg1: i32) -> (i32, i32, i32, i32) {
    %c0_i32 = arith.constant 0 : i32
    %c0_i32_0 = arith.constant 0 : i32
    %c0_i32_1 = arith.constant 0 : i32
    %c0_i32_2 = arith.constant 0 : i32
    return %arg0, %c0_i32, %c0_i32_0, %c0_i32_1 : i32, i32, i32, i32
  }
  func.func @transform_5(%arg0: i32, %arg1: i32) -> (i32, i32, i32) {
    %c0_i32 = arith.constant 0 : i32
    %c0_i32_0 = arith.constant 0 : i32
    %c0_i32_1 = arith.constant 0 : i32
    return %arg0, %c0_i32, %c0_i32_0 : i32, i32, i32
  }
  func.func @transform_6(%arg0: i32, %arg1: i32) -> (i32, i32, i32) {
    %c0_i32 = arith.constant 0 : i32
    %c0_i32_0 = arith.constant 0 : i32
    %c0_i32_1 = arith.constant 0 : i32
    return %arg0, %c0_i32, %c0_i32_0 : i32, i32, i32
  }
  func.func @transform_7(%arg0: i32, %arg1: i32) -> (i32, i32, i32) {
    %c0_i32 = arith.constant 0 : i32
    %c0_i32_0 = arith.constant 0 : i32
    %c0_i32_1 = arith.constant 0 : i32
    return %arg0, %c0_i32, %c0_i32_0 : i32, i32, i32
  }
  func.func @transform_8(%arg0: i32, %arg1: i32) -> (i32, i32) {
    %c0_i32 = arith.constant 0 : i32
    return %arg1, %arg0 : i32, i32
  }
  func.func @transform_9(%arg0: i32, %arg1: i32) -> (i32, i32, i32) {
    %c0_i32 = arith.constant 0 : i32
    %c0_i32_0 = arith.constant 0 : i32
    return %arg0, %arg1, %c0_i32 : i32, i32, i32
  }
  func.func @transform_10(%arg0: i32, %arg1: i32) -> (i32, i32, i32) {
    %c0_i32 = arith.constant 0 : i32
    %c0_i32_0 = arith.constant 0 : i32
    %c0_i32_1 = arith.constant 0 : i32
    return %arg0, %c0_i32, %c0_i32_0 : i32, i32, i32
  }
}

</mosaic_0001>

<llo_original>
// kernel: grvq_forward.1
$region0: #{grvq_forward.1}
  #allocation0 [shape = 'u32[]', space=smem, size = 0x4, offset = 0x4, fixed_abs, tag = 'smem constant byte address 0x4 - core index']
  #allocation1 [shape = 'u32[144,128]{1,0:T(1,128)}', space=vmem, size = 0x12000, scoped, tag = 'internal scratch']
  %s0 = inlined_call_operand.vmem [shape: f32[32,1280], index: 0, kind: input, shape index: {}]
  %s1 = inlined_call_operand.vmem [shape: bf16[2,640,16], index: 1, kind: input, shape index: {}]
  %s2 = inlined_call_operand.vmem [shape: f32[2,1,16], index: 2, kind: input, shape index: {}]
  %s3 = inlined_call_operand.vmem [shape: f32[2,2,64,16], index: 3, kind: input, shape index: {}]
  %s4 = inlined_call_operand.vmem [shape: bf16[2,2,64,16], index: 4, kind: input, shape index: {}]
  %s5 = inlined_call_operand.vmem [shape: f32[2,2,64], index: 5, kind: input, shape index: {}]
  %s6 = inlined_call_operand.vmem [shape: bf16[2,16,640], index: 6, kind: input, shape index: {}]
  %s7 = inlined_call_operand.vmem [shape: f32[2,1,640], index: 7, kind: input, shape index: {}]
  %s8 = inlined_call_operand.hbm [shape: f32[32,1280], index: 8, kind: output, shape index: {0}]
  %s9 = inlined_call_operand.vmem [shape: s32[2,32,2], index: 9, kind: output, shape index: {1}]
  %s10 = inlined_call_operand.hbm [shape: f32[2,1,2], index: 10, kind: output, shape index: {2}]
  %11 = xla_tuple %s8, %s9, %s10
  %s12 = sld [smem:[#allocation0]]
  $region112: #{grvq_forward.1} parent=0
    _
  %s14 = ssub.s32 1, %s12
  %s15 = scalar_select 0, %s14, %s12
  $region1: #{grvq_forward.1} parent=0
    #allocation2 [shape = 'u8[163840]{0}', space=vmem, size = 0x28000, scoped, tag = 'input window, operand 0']
    #allocation3 [shape = 'u8[163840]{0}', space=vmem, size = 0x28000, scoped, tag = 'output window, operand 0']
    #allocation4 [shape = 's32[2]{0}', space=sflag, size = 0x8, scoped, tag = 'scoped memory for grvq_forward.1']
    #allocation5 [shape = 'u8[1024]{0}', space=vmem, size = 0x400, scoped, tag = 'output window, operand 2']
    #allocation6 [shape = 's32[2]{0}', space=sflag, size = 0x8, scoped, tag = 'scoped memory for grvq_forward.1']
    %16 = vsyncpa [#allocation4], 0
    %s17 = scalar_lea.sflag [#allocation4], 1
    %18 = vsyncpa %s17, 0
    %19 = vsyncpa [#allocation6], 0
    %s20 = scalar_lea.sflag [#allocation6], 1
    %21 = vsyncpa %s20, 0
    loop: start=0, step=1, limit=4
    $region2: #{grvq_forward.1} parent=1 // loop_pre_header
      _
    $region3: #{grvq_forward.1} parent=1 // loop_header
      %s23 = sphi 0, %s27
      %p24 = scmp.ge.s32.totalorder %s23, 4
      %s30 = sphi 0, %s42
      %s31 = sphi 0, %s38
      %s32 = sphi 0, %s30
      %s33 = sphi 0, %s31
      %s34 = sphi 0, %s32
      %s35 = sphi 0, %s33
      %s47 = sphi 0, %s49
      %s50 = sphi 0, %s47
      %s51 = sphi 0, %s50
      %s67 = sphi 0, %s51
      %s73 = sphi 0, %s75
      %s76 = sphi 0, %s73
      %s77 = sphi 0, %s76
      %s93 = sphi 0, %s77
      %s99 = sphi 0, %s101
      %s102 = sphi 0, %s99
      %s103 = sphi 0, %s102
      %s119 = sphi 0, %s103
      %s125 = sphi 0, %s127
      %s128 = sphi 0, %s125
      %s129 = sphi 0, %s128
      %s145 = sphi 0, %s129
      %s151 = sphi 0, %s153
      %s154 = sphi 0, %s151
      %s155 = sphi 0, %s154
      %s171 = sphi 0, %s155
      %s177 = sphi 0, %s179
      %s180 = sphi 0, %s177
      %s181 = sphi 0, %s180
      %s197 = sphi 0, %s181
      %s203 = sphi 0, %s205
      %s206 = sphi 0, %s203
      %s207 = sphi 0, %s206
      %s223 = sphi 0, %s207
      %s229 = sphi 0, %s231
      %s232 = sphi 0, %s229
      %s233 = sphi 0, %s232
      %s249 = sphi 0, %s233
      %s257 = sphi 0, %s259
      %s260 = sphi 0, %s257
      %s261 = sphi 0, %s260
      %s277 = sphi 0, %s261
      %s285 = sphi 0, %s287
      %s288 = sphi 0, %s285
      %s289 = sphi 0, %s288
      %s305 = sphi 0, %s289
      %s311 = sphi 0, %s313
      %s314 = sphi 0, %s311
      %s315 = sphi 0, %s314
      %s331 = sphi 0, %s315
    $region4: #{grvq_forward.1} parent=1 // loop_header_branch
      %26 = sbr.rel (%p24) target = $region8
    $region5: #{grvq_forward.1} parent=1 // loop_body
      %s28 = ssub.s32 %s23, 1
      %s29 = ssub.s32 %s23, 2
      %s36 = sadd.s32 1, %s31
      %p37 = scmp.ge.s32.totalorder %s36, 1
      %s38 = scalar_select %p37, 0, %s36
      %s39 = sadd.s32 1, %s30
      %s40 = scalar_select %p37, %s39, %s30
      %p41 = scmp.ge.s32.totalorder %s40, 2
      %s42 = scalar_select %p41, 0, %s40
      %s43 = ssub.s32 %s31, %s38
      %s44 = ssub.s32 %s30, %s42
      %s45 = sor.u32 %s43, %s44
      %p46 = scmp.eq.s32.totalorder %s45, 0
      %s48 = sadd.s32 %s47, 1
      %s49 = scalar_select %p46, %s47, %s48
      %p52 = pneg %p46
      %p53 = scmp.eq.s32.totalorder %s23, 1
      %p54 = por %p52, %p53
      %p55 = scmp.ne.s32.totalorder %s47, %s50
      %p56 = scmp.eq.s32.totalorder %s23, 0
      %p57 = por %p55, %p56
      %p58 = scmp.ne.s32.totalorder %s47, %s50
      %p59 = scmp.eq.s32.totalorder %s28, 1
      %p60 = por %p58, %p59
      %p61 = scmp.ne.s32.totalorder %s50, %s51
      %p62 = scmp.eq.s32.totalorder %s28, 0
      %p63 = por %p61, %p62
      %p64 = scmp.ne.s32.totalorder %s50, %s51
      %p65 = scmp.eq.s32.totalorder %s29, 1
      %p66 = por %p64, %p65
      %p68 = scmp.ne.s32.totalorder %s51, %s67
      %p69 = scmp.eq.s32.totalorder %s29, 0
      %p70 = por %p68, %p69
      %s71 = ssub.s32 %s30, %s42
      %p72 = scmp.eq.s32.totalorder %s71, 0
      %s74 = sadd.s32 %s73, 1
      %s75 = scalar_select %p72, %s73, %s74
      %p78 = pneg %p72
      %p79 = scmp.eq.s32.totalorder %s23, 1
      %p80 = por %p78, %p79
      %p81 = scmp.ne.s32.totalorder %s73, %s76
      %p82 = scmp.eq.s32.totalorder %s23, 0
      %p83 = por %p81, %p82
      %p84 = scmp.ne.s32.totalorder %s73, %s76
      %p85 = scmp.eq.s32.totalorder %s28, 1
      %p86 = por %p84, %p85
      %p87 = scmp.ne.s32.totalorder %s76, %s77
      %p88 = scmp.eq.s32.totalorder %s28, 0
      %p89 = por %p87, %p88
      %p90 = scmp.ne.s32.totalorder %s76, %s77
      %p91 = scmp.eq.s32.totalorder %s29, 1
      %p92 = por %p90, %p91
      %p94 = scmp.ne.s32.totalorder %s77, %s93
      %p95 = scmp.eq.s32.totalorder %s29, 0
      %p96 = por %p94, %p95
      %s97 = ssub.s32 %s30, %s42
      %p98 = scmp.eq.s32.totalorder %s97, 0
      %s100 = sadd.s32 %s99, 1
      %s101 = scalar_select %p98, %s99, %s100
      %p104 = pneg %p98
      %p105 = scmp.eq.s32.totalorder %s23, 1
      %p106 = por %p104, %p105
      %p107 = scmp.ne.s32.totalorder %s99, %s102
      %p108 = scmp.eq.s32.totalorder %s23, 0
      %p109 = por %p107, %p108
      %p110 = scmp.ne.s32.totalorder %s99, %s102
      %p111 = scmp.eq.s32.totalorder %s28, 1
      %p112 = por %p110, %p111
      %p113 = scmp.ne.s32.totalorder %s102, %s103
      %p114 = scmp.eq.s32.totalorder %s28, 0
      %p115 = por %p113, %p114
      %p116 = scmp.ne.s32.totalorder %s102, %s103
      %p117 = scmp.eq.s32.totalorder %s29, 1
      %p118 = por %p116, %p117
      %p120 = scmp.ne.s32.totalorder %s103, %s119
      %p121 = scmp.eq.s32.totalorder %s29, 0
      %p122 = por %p120, %p121
      %s123 = ssub.s32 %s30, %s42
      %p124 = scmp.eq.s32.totalorder %s123, 0
      %s126 = sadd.s32 %s125, 1
      %s127 = scalar_select %p124, %s125, %s126
      %p130 = pneg %p124
      %p131 = scmp.eq.s32.totalorder %s23, 1
      %p132 = por %p130, %p131
      %p133 = scmp.ne.s32.totalorder %s125, %s128
      %p134 = scmp.eq.s32.totalorder %s23, 0
      %p135 = por %p133, %p134
      %p136 = scmp.ne.s32.totalorder %s125, %s128
      %p137 = scmp.eq.s32.totalorder %s28, 1
      %p138 = por %p136, %p137
      %p139 = scmp.ne.s32.totalorder %s128, %s129
      %p140 = scmp.eq.s32.totalorder %s28, 0
      %p141 = por %p139, %p140
      %p142 = scmp.ne.s32.totalorder %s128, %s129
      %p143 = scmp.eq.s32.totalorder %s29, 1
      %p144 = por %p142, %p143
      %p146 = scmp.ne.s32.totalorder %s129, %s145
      %p147 = scmp.eq.s32.totalorder %s29, 0
      %p148 = por %p146, %p147
      %s149 = ssub.s32 %s30, %s42
      %p150 = scmp.eq.s32.totalorder %s149, 0
      %s152 = sadd.s32 %s151, 1
      %s153 = scalar_select %p150, %s151, %s152
      %p156 = pneg %p150
      %p157 = scmp.eq.s32.totalorder %s23, 1
      %p158 = por %p156, %p157
      %p159 = scmp.ne.s32.totalorder %s151, %s154
      %p160 = scmp.eq.s32.totalorder %s23, 0
      %p161 = por %p159, %p160
      %p162 = scmp.ne.s32.totalorder %s151, %s154
      %p163 = scmp.eq.s32.totalorder %s28, 1
      %p164 = por %p162, %p163
      %p165 = scmp.ne.s32.totalorder %s154, %s155
      %p166 = scmp.eq.s32.totalorder %s28, 0
      %p167 = por %p165, %p166
      %p168 = scmp.ne.s32.totalorder %s154, %s155
      %p169 = scmp.eq.s32.totalorder %s29, 1
      %p170 = por %p168, %p169
      %p172 = scmp.ne.s32.totalorder %s155, %s171
      %p173 = scmp.eq.s32.totalorder %s29, 0
      %p174 = por %p172, %p173
      %s175 = ssub.s32 %s30, %s42
      %p176 = scmp.eq.s32.totalorder %s175, 0
      %s178 = sadd.s32 %s177, 1
      %s179 = scalar_select %p176, %s177, %s178
      %p182 = pneg %p176
      %p183 = scmp.eq.s32.totalorder %s23, 1
      %p184 = por %p182, %p183
      %p185 = scmp.ne.s32.totalorder %s177, %s180
      %p186 = scmp.eq.s32.totalorder %s23, 0
      %p187 = por %p185, %p186
      %p188 = scmp.ne.s32.totalorder %s177, %s180
      %p189 = scmp.eq.s32.totalorder %s28, 1
      %p190 = por %p188, %p189
      %p191 = scmp.ne.s32.totalorder %s180, %s181
      %p192 = scmp.eq.s32.totalorder %s28, 0
      %p193 = por %p191, %p192
      %p194 = scmp.ne.s32.totalorder %s180, %s181
      %p195 = scmp.eq.s32.totalorder %s29, 1
      %p196 = por %p194, %p195
      %p198 = scmp.ne.s32.totalorder %s181, %s197
      %p199 = scmp.eq.s32.totalorder %s29, 0
      %p200 = por %p198, %p199
      %s201 = ssub.s32 %s30, %s42
      %p202 = scmp.eq.s32.totalorder %s201, 0
      %s204 = sadd.s32 %s203, 1
      %s205 = scalar_select %p202, %s203, %s204
      %p208 = pneg %p202
      %p209 = scmp.eq.s32.totalorder %s23, 1
      %p210 = por %p208, %p209
      %p211 = scmp.ne.s32.totalorder %s203, %s206
      %p212 = scmp.eq.s32.totalorder %s23, 0
      %p213 = por %p211, %p212
      %p214 = scmp.ne.s32.totalorder %s203, %s206
      %p215 = scmp.eq.s32.totalorder %s28, 1
      %p216 = por %p214, %p215
      %p217 = scmp.ne.s32.totalorder %s206, %s207
      %p218 = scmp.eq.s32.totalorder %s28, 0
      %p219 = por %p217, %p218
      %p220 = scmp.ne.s32.totalorder %s206, %s207
      %p221 = scmp.eq.s32.totalorder %s29, 1
      %p222 = por %p220, %p221
      %p224 = scmp.ne.s32.totalorder %s207, %s223
      %p225 = scmp.eq.s32.totalorder %s29, 0
      %p226 = por %p224, %p225
      %s227 = ssub.s32 %s30, %s42
      %p228 = scmp.eq.s32.totalorder %s227, 0
      %s230 = sadd.s32 %s229, 1
      %s231 = scalar_select %p228, %s229, %s230
      %p234 = pneg %p228
      %p235 = scmp.eq.s32.totalorder %s23, 1
      %p236 = por %p234, %p235
      %p237 = scmp.ne.s32.totalorder %s229, %s232
      %p238 = scmp.eq.s32.totalorder %s23, 0
      %p239 = por %p237, %p238
      %p240 = scmp.ne.s32.totalorder %s229, %s232
      %p241 = scmp.eq.s32.totalorder %s28, 1
      %p242 = por %p240, %p241
      %p243 = scmp.ne.s32.totalorder %s232, %s233
      %p244 = scmp.eq.s32.totalorder %s28, 0
      %p245 = por %p243, %p244
      %p246 = scmp.ne.s32.totalorder %s232, %s233
      %p247 = scmp.eq.s32.totalorder %s29, 1
      %p248 = por %p246, %p247
      %p250 = scmp.ne.s32.totalorder %s233, %s249
      %p251 = scmp.eq.s32.totalorder %s29, 0
      %p252 = por %p250, %p251
      %s253 = ssub.s32 %s31, %s38
      %s254 = ssub.s32 %s30, %s42
      %s255 = sor.u32 %s253, %s254
      %p256 = scmp.eq.s32.totalorder %s255, 0
      %s258 = sadd.s32 %s257, 1
      %s259 = scalar_select %p256, %s257, %s258
      %p262 = pneg %p256
      %p263 = scmp.eq.s32.totalorder %s23, 1
      %p264 = por %p262, %p263
      %p265 = scmp.ne.s32.totalorder %s257, %s260
      %p266 = scmp.eq.s32.totalorder %s23, 0
      %p267 = por %p265, %p266
      %p268 = scmp.ne.s32.totalorder %s257, %s260
      %p269 = scmp.eq.s32.totalorder %s28, 1
      %p270 = por %p268, %p269
      %p271 = scmp.ne.s32.totalorder %s260, %s261
      %p272 = scmp.eq.s32.totalorder %s28, 0
      %p273 = por %p271, %p272
      %p274 = scmp.ne.s32.totalorder %s260, %s261
      %p275 = scmp.eq.s32.totalorder %s29, 1
      %p276 = por %p274, %p275
      %p278 = scmp.ne.s32.totalorder %s261, %s277
      %p279 = scmp.eq.s32.totalorder %s29, 0
      %p280 = por %p278, %p279
      %s281 = ssub.s32 %s30, %s42
      %s282 = ssub.s32 %s31, %s38
      %s283 = sor.u32 %s281, %s282
      %p284 = scmp.eq.s32.totalorder %s283, 0
      %s286 = sadd.s32 %s285, 1
      %s287 = scalar_select %p284, %s285, %s286
      %p290 = pneg %p284
      %p291 = scmp.eq.s32.totalorder %s23, 1
      %p292 = por %p290, %p291
      %p293 = scmp.ne.s32.totalorder %s285, %s288
      %p294 = scmp.eq.s32.totalorder %s23, 0
      %p295 = por %p293, %p294
      %p296 = scmp.ne.s32.totalorder %s285, %s288
      %p297 = scmp.eq.s32.totalorder %s28, 1
      %p298 = por %p296, %p297
      %p299 = scmp.ne.s32.totalorder %s288, %s289
      %p300 = scmp.eq.s32.totalorder %s28, 0
      %p301 = por %p299, %p300
      %p302 = scmp.ne.s32.totalorder %s288, %s289
      %p303 = scmp.eq.s32.totalorder %s29, 1
      %p304 = por %p302, %p303
      %p306 = scmp.ne.s32.totalorder %s289, %s305
      %p307 = scmp.eq.s32.totalorder %s29, 0
      %p308 = por %p306, %p307
      %s309 = ssub.s32 %s30, %s42
      %p310 = scmp.eq.s32.totalorder %s309, 0
      %s312 = sadd.s32 %s311, 1
      %s313 = scalar_select %p310, %s311, %s312
      %p316 = pneg %p310
      %p317 = scmp.eq.s32.totalorder %s23, 1
      %p318 = por %p316, %p317
      %p319 = scmp.ne.s32.totalorder %s311, %s314
      %p320 = scmp.eq.s32.totalorder %s23, 0
      %p321 = por %p319, %p320
      %p322 = scmp.ne.s32.totalorder %s311, %s314
      %p323 = scmp.eq.s32.totalorder %s28, 1
      %p324 = por %p322, %p323
      %p325 = scmp.ne.s32.totalorder %s314, %s315
      %p326 = scmp.eq.s32.totalorder %s28, 0
      %p327 = por %p325, %p326
      %p328 = scmp.ne.s32.totalorder %s314, %s315
      %p329 = scmp.eq.s32.totalorder %s29, 1
      %p330 = por %p328, %p329
      %p332 = scmp.ne.s32.totalorder %s315, %s331
      %p333 = scmp.eq.s32.totalorder %s29, 0
      %p334 = por %p332, %p333
      %p335 = scmp.le.s32.totalorder 1, %s23
      %p336 = scmp.lt.s32.totalorder %s23, 3
      %p337 = pnand %p335, %p336
      %p338 = pneg %p337
      // Predicated region
      $region9: #{grvq_forward.1} parent=5 // pred_check
        _
      $region10: #{grvq_forward.1} parent=5 // pred_check_branch
        %340 = sbr.rel (%p337) target = $region12
      $region11: #{grvq_forward.1} parent=5 // pred_region
        %s341 = ssub.s32 %s23, 1
      $region12: #{grvq_forward.1} parent=5 // pred_fallthru
        _
      %p342 = scmp.lt.s32.totalorder %s23, 2
      // Predicated region
      $region13: #{grvq_forward.1} parent=5 // pred_check
        %p343 = pneg %p342
      $region14: #{grvq_forward.1} parent=5 // pred_check_branch
        %345 = sbr.rel (%p343) target = $region16
      $region15: #{grvq_forward.1} parent=5 // pred_region
        // Predicated region
        $region17: #{grvq_forward.1} parent=15 // pred_check
          %p346 = pneg %p57
        $region18: #{grvq_forward.1} parent=15 // pred_check_branch
          %348 = sbr.rel (%p346) target = $region20
        $region19: #{grvq_forward.1} parent=15 // pred_region
          %s349 = sand.u32 %s47, 1
          %s350 = sand.u32 %s47, 1
          %s351 = smul.addr %s350, 160
          %s352 = scalar_lea.vmem [#allocation2], %s351
          %s353 = smul.u32 4, %s31
          %s354 = smul.u32 5, %s30
          %s355 = smul.addr %s353, 10
          %s356 = sadd.s32 %s354, %s355
          %s357 = smul.addr %s356, 8
          %s358 = scalar_lea.vmem %s0, %s357
          // Predicated region
          $region21: #{grvq_forward.1} parent=19 // pred_check
            _
          $region22: #{grvq_forward.1} parent=19 // pred_check_branch
            %360 = sbr.rel (0) target = $region24
          $region23: #{grvq_forward.1} parent=19 // pred_region
            // Predicated region
            $region25: #{grvq_forward.1} parent=23 // pred_check
              _
            $region26: #{grvq_forward.1} parent=23 // pred_check_branch
              %362 = sbr.rel (0) target = $region28
            $region27: #{grvq_forward.1} parent=23 // pred_region
              loop: start=0, step=1, limit=1
              $region29: #{grvq_forward.1} parent=27 // loop_pre_header
                _
              $region30: #{grvq_forward.1} parent=27 // loop_header
                %s364 = sphi 0, %s368
                %p365 = scmp.ge.s32.totalorder %s364, 1
                %s369 = sphi %s358, %s358
                %s370 = sphi %s352, %s352
              $region31: #{grvq_forward.1} parent=27 // loop_header_branch
                %367 = sbr.rel (%p365) target = $region35
              $region32: #{grvq_forward.1} parent=27 // loop_body
                %v371 = vld [vmem:[%s369] sm:$0xff]
                %372 = vst [vmem:[%s370] sm:$0xff] %v371
                %v373 = vld [vmem:[%s369 + $0x8] sm:$0xff]
                %374 = vst [vmem:[%s370 + $0x8] sm:$0xff] %v373
                %v375 = vld [vmem:[%s369 + $0x10] sm:$0xff]
                %376 = vst [vmem:[%s370 + $0x10] sm:$0xff] %v375
                %v377 = vld [vmem:[%s369 + $0x18] sm:$0xff]
                %378 = vst [vmem:[%s370 + $0x18] sm:$0xff] %v377
                %v379 = vld [vmem:[%s369 + $0x20] sm:$0xff]
                %380 = vst [vmem:[%s370 + $0x20] sm:$0xff] %v379
                %v381 = vld [vmem:[%s369 + $0x50] sm:$0xff]
                %382 = vst [vmem:[%s370 + $0x28] sm:$0xff] %v381
                %v383 = vld [vmem:[%s369 + $0x58] sm:$0xff]
                %384 = vst [vmem:[%s370 + $0x30] sm:$0xff] %v383
                %v385 = vld [vmem:[%s369 + $0x60] sm:$0xff]
                %386 = vst [vmem:[%s370 + $0x38] sm:$0xff] %v385
                %v387 = vld [vmem:[%s369 + $0x68] sm:$0xff]
                %388 = vst [vmem:[%s370 + $0x40] sm:$0xff] %v387
                %v389 = vld [vmem:[%s369 + $0x70] sm:$0xff]
                %390 = vst [vmem:[%s370 + $0x48] sm:$0xff] %v389
                %v391 = vld [vmem:[%s369 + $0xa0] sm:$0xff]
                %392 = vst [vmem:[%s370 + $0x50] sm:$0xff] %v391
                %v393 = vld [vmem:[%s369 + $0xa8] sm:$0xff]
                %394 = vst [vmem:[%s370 + $0x58] sm:$0xff] %v393
                %v395 = vld [vmem:[%s369 + $0xb0] sm:$0xff]
                %396 = vst [vmem:[%s370 + $0x60] sm:$0xff] %v395
                %v397 = vld [vmem:[%s369 + $0xb8] sm:$0xff]
                %398 = vst [vmem:[%s370 + $0x68] sm:$0xff] %v397
                %v399 = vld [vmem:[%s369 + $0xc0] sm:$0xff]
                %400 = vst [vmem:[%s370 + $0x70] sm:$0xff] %v399
                %v401 = vld [vmem:[%s369 + $0xf0] sm:$0xff]
                %402 = vst [vmem:[%s370 + $0x78] sm:$0xff] %v401
                %v403 = vld [vmem:[%s369 + $0xf8] sm:$0xff]
                %404 = vst [vmem:[%s370 + $0x80] sm:$0xff] %v403
                %v405 = vld [vmem:[%s369 + $0x100] sm:$0xff]
                %406 = vst [vmem:[%s370 + $0x88] sm:$0xff] %v405
                %v407 = vld [vmem:[%s369 + $0x108] sm:$0xff]
                %408 = vst [vmem:[%s370 + $0x90] sm:$0xff] %v407
                %v409 = vld [vmem:[%s369 + $0x110] sm:$0xff]
                %410 = vst [vmem:[%s370 + $0x98] sm:$0xff] %v409
              $region33: #{grvq_forward.1} parent=27 // loop_footer
                %s368 = sadd.s32 1, %s364
              $region34: #{grvq_forward.1} parent=27 // loop_footer_branch
                %363 = sbr.rel target = $region30
              $region35: #{grvq_forward.1} parent=27 // loop_exit
                _
            $region28: #{grvq_forward.1} parent=23 // pred_fallthru
              _
            // Predicated region
            $region36: #{grvq_forward.1} parent=23 // pred_check
              _
            $region37: #{grvq_forward.1} parent=23 // pred_check_branch
              %412 = sbr.rel target = $region39
            $region38: #{grvq_forward.1} parent=23 // pred_region
              _
            $region39: #{grvq_forward.1} parent=23 // pred_fallthru
              _
          $region24: #{grvq_forward.1} parent=19 // pred_fallthru
            _
          %413 = vnop
        $region20: #{grvq_forward.1} parent=15 // pred_fallthru
          _
        // Predicated region
        $region40: #{grvq_forward.1} parent=15 // pred_check
          %p414 = pneg %p83
        $region41: #{grvq_forward.1} parent=15 // pred_check_branch
          %416 = sbr.rel (%p414) target = $region43
        $region42: #{grvq_forward.1} parent=15 // pred_region
          %p417 = scmp.lt.s32.totalorder %s30, 1
          %s418 = scalar_select %p417, %s30, 1
          %s419 = smul.addr %s418, 80
          %s420 = smul.addr %s419, 4
          %s421 = scalar_lea.vmem %s1, %s420
        $region43: #{grvq_forward.1} parent=15 // pred_fallthru
          _
        // Predicated region
        $region44: #{grvq_forward.1} parent=15 // pred_check
          %p422 = pneg %p109
        $region45: #{grvq_forward.1} parent=15 // pred_check_branch
          %424 = sbr.rel (%p422) target = $region47
        $region46: #{grvq_forward.1} parent=15 // pred_region
          %p425 = scmp.lt.s32.totalorder %s30, 1
          %s426 = scalar_select %p425, %s30, 1
          %s427 = scalar_lea.vmem %s2, %s426
        $region47: #{grvq_forward.1} parent=15 // pred_fallthru
          _
        // Predicated region
        $region48: #{grvq_forward.1} parent=15 // pred_check
          %p428 = pneg %p135
        $region49: #{grvq_forward.1} parent=15 // pred_check_branch
          %430 = sbr.rel (%p428) target = $region51
        $region50: #{grvq_forward.1} parent=15 // pred_region
          %p431 = scmp.lt.s32.totalorder %s30, 1
          %s432 = scalar_select %p431, %s30, 1
          %s433 = smul.addr %s432, 16
          %s434 = smul.addr %s433, 8
          %s435 = scalar_lea.vmem %s3, %s434
        $region51: #{grvq_forward.1} parent=15 // pred_fallthru
          _
        // Predicated region
        $region52: #{grvq_forward.1} parent=15 // pred_check
          %p436 = pneg %p161
        $region53: #{grvq_forward.1} parent=15 // pred_check_branch
          %438 = sbr.rel (%p436) target = $region55
        $region54: #{grvq_forward.1} parent=15 // pred_region
          %p439 = scmp.lt.s32.totalorder %s30, 1
          %s440 = scalar_select %p439, %s30, 1
          %s441 = smul.addr %s440, 16
          %s442 = smul.addr %s441, 4
          %s443 = scalar_lea.vmem %s4, %s442
        $region55: #{grvq_forward.1} parent=15 // pred_fallthru
          _
        // Predicated region
        $region56: #{grvq_forward.1} parent=15 // pred_check
          %p444 = pneg %p187
        $region57: #{grvq_forward.1} parent=15 // pred_check_branch
          %446 = sbr.rel (%p444) target = $region59
        $region58: #{grvq_forward.1} parent=15 // pred_region
          %p447 = scmp.lt.s32.totalorder %s30, 1
          %s448 = scalar_select %p447, %s30, 1
          %s449 = smul.addr %s448, 2
          %s450 = scalar_lea.vmem %s5, %s449
        $region59: #{grvq_forward.1} parent=15 // pred_fallthru
          _
        // Predicated region
        $region60: #{grvq_forward.1} parent=15 // pred_check
          %p451 = pneg %p213
        $region61: #{grvq_forward.1} parent=15 // pred_check_branch
          %453 = sbr.rel (%p451) target = $region63
        $region62: #{grvq_forward.1} parent=15 // pred_region
          %p454 = scmp.lt.s32.totalorder %s30, 1
          %s455 = scalar_select %p454, %s30, 1
          %s456 = smul.addr %s455, 10
          %s457 = smul.addr %s456, 4
          %s458 = scalar_lea.vmem %s6, %s457
        $region63: #{grvq_forward.1} parent=15 // pred_fallthru
          _
        // Predicated region
        $region64: #{grvq_forward.1} parent=15 // pred_check
          %p459 = pneg %p239
        $region65: #{grvq_forward.1} parent=15 // pred_check_branch
          %461 = sbr.rel (%p459) target = $region67
        $region66: #{grvq_forward.1} parent=15 // pred_region
          %p462 = scmp.lt.s32.totalorder %s30, 1
          %s463 = scalar_select %p462, %s30, 1
          %s464 = smul.addr %s463, 5
          %s465 = scalar_lea.vmem %s7, %s464
        $region67: #{grvq_forward.1} parent=15 // pred_fallthru
          _
      $region16: #{grvq_forward.1} parent=5 // pred_fallthru
        _
      %p466 = scmp.le.s32.totalorder 1, %s23
      %p467 = scmp.lt.s32.totalorder %s23, 3
      %p468 = pnand %p466, %p467
      %p469 = pneg %p468
      // Predicated region
      $region68: #{grvq_forward.1} parent=5 // pred_check
        _
      $region69: #{grvq_forward.1} parent=5 // pred_check_branch
        %471 = sbr.rel (%p468) target = $region71
      $region70: #{grvq_forward.1} parent=5 // pred_region
        %s472 = ssub.s32 %s23, 1
        %s473 = sand.u32 %s50, 1
        %s474 = sand.u32 %s50, 1
        %s475 = smul.addr %s474, 160
        %s476 = scalar_lea.vmem [#allocation2], %s475
        // Predicated region
        $region72: #{grvq_forward.1} parent=70 // pred_check
          %p477 = pneg %p63
        $region73: #{grvq_forward.1} parent=70 // pred_check_branch
          %479 = sbr.rel (%p477) target = $region75
        $region74: #{grvq_forward.1} parent=70 // pred_region
          _
        $region75: #{grvq_forward.1} parent=70 // pred_fallthru
          _
        %s480 = sand.u32 %s50, 1
        %s481 = sand.u32 %s50, 1
        %s482 = smul.addr %s481, 160
        %s483 = scalar_lea.vmem [#allocation2], %s482
        %p484 = pneg %p63
        %p485 = pneg %p60
        %p486 = scmp.lt.s32.totalorder %s32, 1
        %s487 = scalar_select %p486, %s32, 1
        %s488 = smul.addr %s487, 80
        %s489 = smul.addr %s488, 4
        %s490 = scalar_lea.vmem %s1, %s489
        %p491 = pneg %p89
        %p492 = pneg %p86
        %p493 = scmp.lt.s32.totalorder %s32, 1
        %s494 = scalar_select %p493, %s32, 1
        %s495 = scalar_lea.vmem %s2, %s494
        %p496 = pneg %p115
        %p497 = pneg %p112
        %p498 = scmp.lt.s32.totalorder %s32, 1
        %s499 = scalar_select %p498, %s32, 1
        %s500 = smul.addr %s499, 16
        %s501 = smul.addr %s500, 8
        %s502 = scalar_lea.vmem %s3, %s501
        %p503 = pneg %p141
        %p504 = pneg %p138
        %p505 = scmp.lt.s32.totalorder %s32, 1
        %s506 = scalar_select %p505, %s32, 1
        %s507 = smul.addr %s506, 16
        %s508 = smul.addr %s507, 4
        %s509 = scalar_lea.vmem %s4, %s508
        %p510 = pneg %p167
        %p511 = pneg %p164
        %p512 = scmp.lt.s32.totalorder %s32, 1
        %s513 = scalar_select %p512, %s32, 1
        %s514 = smul.addr %s513, 2
        %s515 = scalar_lea.vmem %s5, %s514
        %p516 = pneg %p193
        %p517 = pneg %p190
        %p518 = scmp.lt.s32.totalorder %s32, 1
        %s519 = scalar_select %p518, %s32, 1
        %s520 = smul.addr %s519, 10
        %s521 = smul.addr %s520, 4
        %s522 = scalar_lea.vmem %s6, %s521
        %p523 = pneg %p219
        %p524 = pneg %p216
        %p525 = scmp.lt.s32.totalorder %s32, 1
        %s526 = scalar_select %p525, %s32, 1
        %s527 = smul.addr %s526, 5
        %s528 = scalar_lea.vmem %s7, %s527
        %p529 = pneg %p245
        %p530 = pneg %p242
        %p531 = pneg %p273
        %p532 = pneg %p270
        %s533 = sand.u32 %s260, 1
        %s534 = scalar_lea.sflag [#allocation4], %s533
        %s535 = sand.u32 %s260, 1
        %s536 = smul.addr %s535, 160
        %s537 = scalar_lea.vmem [#allocation3], %s536
        %p538 = pneg %p301
        %p539 = pneg %p298
        %s540 = smul.u32 4, %s33
        %p541 = scmp.lt.s32.totalorder %s32, 1
        %s542 = scalar_select %p541, %s32, 1
        %p543 = scmp.lt.s32.totalorder %s540, 3
        %s544 = scalar_select %p543, %s540, 3
        %s545 = smul.addr %s542, 4
        %s546 = sadd.s32 %s544, %s545
        %s547 = smul.addr %s546, 8
        %s548 = scalar_lea.vmem %s9, %s547
        %p549 = pneg %p327
        %p550 = pneg %p324
        %s551 = sand.u32 %s314, 1
        %s552 = scalar_lea.sflag [#allocation6], %s551
        %s553 = sand.u32 %s314, 1
        %s554 = scalar_lea.vmem [#allocation5], %s553
        %s555 = smul.u32 4, %s33
        %s556 = smul.u32 5, %s32
        %p557 = scmp.lt.s32.totalorder %s32, 1
        %s558 = scalar_select %p557, %s32, 1
        %s559 = smul.addr %s558, 80
        %s560 = smul.addr %s559, 4
        %s561 = scalar_lea.vmem %s1, %s560
        %p562 = scmp.lt.s32.totalorder %s32, 1
        %s563 = scalar_select %p562, %s32, 1
        %s564 = scalar_lea.vmem %s2, %s563
        %p565 = scmp.lt.s32.totalorder %s32, 1
        %s566 = scalar_select %p565, %s32, 1
        %s567 = smul.addr %s566, 16
        %s568 = smul.addr %s567, 8
        %s569 = scalar_lea.vmem %s3, %s568
        %p570 = scmp.lt.s32.totalorder %s32, 1
        %s571 = scalar_select %p570, %s32, 1
        %s572 = smul.addr %s571, 16
        %s573 = smul.addr %s572, 4
        %s574 = scalar_lea.vmem %s4, %s573
        %p575 = scmp.lt.s32.totalorder %s32, 1
        %s576 = scalar_select %p575, %s32, 1
        %s577 = smul.addr %s576, 2
        %s578 = scalar_lea.vmem %s5, %s577
        %p579 = scmp.lt.s32.totalorder %s32, 1
        %s580 = scalar_select %p579, %s32, 1
        %s581 = smul.addr %s580, 10
        %s582 = smul.addr %s581, 4
        %s583 = scalar_lea.vmem %s6, %s582
        %p584 = scmp.lt.s32.totalorder %s32, 1
        %s585 = scalar_select %p584, %s32, 1
        %s586 = smul.addr %s585, 5
        %s587 = scalar_lea.vmem %s7, %s586
        %s588 = smul.u32 4, %s33
        %s589 = smul.u32 5, %s32
        %s590 = smul.u32 4, %s33
        %p591 = scmp.lt.s32.totalorder %s32, 1
        %s592 = scalar_select %p591, %s32, 1
        %p593 = scmp.lt.s32.totalorder %s590, 3
        %s594 = scalar_select %p593, %s590, 3
        %s595 = smul.addr %s592, 4
        %s596 = sadd.s32 %s594, %s595
        %s597 = smul.addr %s596, 8
        %s598 = scalar_lea.vmem %s9, %s597
        %s599 = smul.u32 4, %s33
        %p601 = scmp.eq.s32.totalorder %s33, 0
        // Predicated region
        $region76: #{grvq_forward.1} parent=70 // pred_check
          %p602 = pneg %p601
        $region77: #{grvq_forward.1} parent=70 // pred_check_branch
          %604 = sbr.rel (%p602) target = $region79
        $region78: #{grvq_forward.1} parent=70 // pred_region
          %vm605 = vcmask 8192
          %606 = vst.msk [vmem:[%s554] sm:$0x1] %vm605, 0.0
        $region79: #{grvq_forward.1} parent=70 // pred_fallthru
          _
        %v607 = vld [vmem:[%s476] sm:$0xff]
        %v608 = vld [vmem:[%s476 + $0x8] sm:$0xff]
        %v609 = vld [vmem:[%s476 + $0x10] sm:$0xff]
        %v610 = vld [vmem:[%s476 + $0x18] sm:$0xff]
        %v611 = vld [vmem:[%s476 + $0x20] sm:$0xff]
        %v612 = vld [vmem:[%s476 + $0x28] sm:$0xff]
        %v613 = vld [vmem:[%s476 + $0x30] sm:$0xff]
        %v614 = vld [vmem:[%s476 + $0x38] sm:$0xff]
        %v615 = vld [vmem:[%s476 + $0x40] sm:$0xff]
        %v616 = vld [vmem:[%s476 + $0x48] sm:$0xff]
        %v617 = vld [vmem:[%s476 + $0x50] sm:$0xff]
        %v618 = vld [vmem:[%s476 + $0x58] sm:$0xff]
        %v619 = vld [vmem:[%s476 + $0x60] sm:$0xff]
        %v620 = vld [vmem:[%s476 + $0x68] sm:$0xff]
        %v621 = vld [vmem:[%s476 + $0x70] sm:$0xff]
        %v622 = vld [vmem:[%s476 + $0x78] sm:$0xff]
        %v623 = vld [vmem:[%s476 + $0x80] sm:$0xff]
        %v624 = vld [vmem:[%s476 + $0x88] sm:$0xff]
        %v625 = vld [vmem:[%s476 + $0x90] sm:$0xff]
        %v626 = vld [vmem:[%s476 + $0x98] sm:$0xff]
        %v627 = vpack.c.bf16 %v612, %v607
        %v628 = vpack.c.bf16 %v613, %v608
        %v629 = vpack.c.bf16 %v614, %v609
        %v630 = vpack.c.bf16 %v615, %v610
        %v631 = vpack.c.bf16 %v616, %v611
        %v632 = vpack.c.bf16 %v622, %v617
        %v633 = vpack.c.bf16 %v623, %v618
        %v634 = vpack.c.bf16 %v624, %v619
        %v635 = vpack.c.bf16 %v625, %v620
        %v636 = vpack.c.bf16 %v626, %v621
        %v637 = vld [vmem:[%s561] sm:$0xf]
        %v638 = vld [vmem:[%s561 + $0x4] sm:$0xf]
        %v639 = vld [vmem:[%s561 + $0x8] sm:$0xf]
        %v640 = vld [vmem:[%s561 + $0xc] sm:$0xf]
        %v641 = vld [vmem:[%s561 + $0x10] sm:$0xf]
        %v642 = vld [vmem:[%s561 + $0x14] sm:$0xf]
        %v643 = vld [vmem:[%s561 + $0x18] sm:$0xf]
        %v644 = vld [vmem:[%s561 + $0x1c] sm:$0xf]
        %v645 = vld [vmem:[%s561 + $0x20] sm:$0xf]
        %v646 = vld [vmem:[%s561 + $0x24] sm:$0xf]
        %v647 = vld [vmem:[%s561 + $0x28] sm:$0xf]
        %v648 = vld [vmem:[%s561 + $0x2c] sm:$0xf]
        %v649 = vld [vmem:[%s561 + $0x30] sm:$0xf]
        %v650 = vld [vmem:[%s561 + $0x34] sm:$0xf]
        %v651 = vld [vmem:[%s561 + $0x38] sm:$0xf]
        %v652 = vld [vmem:[%s561 + $0x3c] sm:$0xf]
        %v653 = vld [vmem:[%s561 + $0x40] sm:$0xf]
        %v654 = vld [vmem:[%s561 + $0x44] sm:$0xf]
        %v655 = vld [vmem:[%s561 + $0x48] sm:$0xf]
        %v656 = vld [vmem:[%s561 + $0x4c] sm:$0xf]
        %v657 = vld [vmem:[%s561 + $0x50] sm:$0xf]
        %v658 = vld [vmem:[%s561 + $0x54] sm:$0xf]
        %v659 = vld [vmem:[%s561 + $0x58] sm:$0xf]
        %v660 = vld [vmem:[%s561 + $0x5c] sm:$0xf]
        %v661 = vld [vmem:[%s561 + $0x60] sm:$0xf]
        %v662 = vld [vmem:[%s561 + $0x64] sm:$0xf]
        %v663 = vld [vmem:[%s561 + $0x68] sm:$0xf]
        %v664 = vld [vmem:[%s561 + $0x6c] sm:$0xf]
        %v665 = vld [vmem:[%s561 + $0x70] sm:$0xf]
        %v666 = vld [vmem:[%s561 + $0x74] sm:$0xf]
        %v667 = vld [vmem:[%s561 + $0x78] sm:$0xf]
        %v668 = vld [vmem:[%s561 + $0x7c] sm:$0xf]
        %v669 = vld [vmem:[%s561 + $0x80] sm:$0xf]
        %v670 = vld [vmem:[%s561 + $0x84] sm:$0xf]
        %v671 = vld [vmem:[%s561 + $0x88] sm:$0xf]
        %v672 = vld [vmem:[%s561 + $0x8c] sm:$0xf]
        %v673 = vld [vmem:[%s561 + $0x90] sm:$0xf]
        %v674 = vld [vmem:[%s561 + $0x94] sm:$0xf]
        %v675 = vld [vmem:[%s561 + $0x98] sm:$0xf]
        %v676 = vld [vmem:[%s561 + $0x9c] sm:$0xf]
        %v677 = vld [vmem:[%s561 + $0xa0] sm:$0xf]
        %v678 = vld [vmem:[%s561 + $0xa4] sm:$0xf]
        %v679 = vld [vmem:[%s561 + $0xa8] sm:$0xf]
        %v680 = vld [vmem:[%s561 + $0xac] sm:$0xf]
        %v681 = vld [vmem:[%s561 + $0xb0] sm:$0xf]
        %v682 = vld [vmem:[%s561 + $0xb4] sm:$0xf]
        %v683 = vld [vmem:[%s561 + $0xb8] sm:$0xf]
        %v684 = vld [vmem:[%s561 + $0xbc] sm:$0xf]
        %v685 = vld [vmem:[%s561 + $0xc0] sm:$0xf]
        %v686 = vld [vmem:[%s561 + $0xc4] sm:$0xf]
        %v687 = vld [vmem:[%s561 + $0xc8] sm:$0xf]
        %v688 = vld [vmem:[%s561 + $0xcc] sm:$0xf]
        %v689 = vld [vmem:[%s561 + $0xd0] sm:$0xf]
        %v690 = vld [vmem:[%s561 + $0xd4] sm:$0xf]
        %v691 = vld [vmem:[%s561 + $0xd8] sm:$0xf]
        %v692 = vld [vmem:[%s561 + $0xdc] sm:$0xf]
        %v693 = vld [vmem:[%s561 + $0xe0] sm:$0xf]
        %v694 = vld [vmem:[%s561 + $0xe4] sm:$0xf]
        %v695 = vld [vmem:[%s561 + $0xe8] sm:$0xf]
        %v696 = vld [vmem:[%s561 + $0xec] sm:$0xf]
        %v697 = vld [vmem:[%s561 + $0xf0] sm:$0xf]
        %v698 = vld [vmem:[%s561 + $0xf4] sm:$0xf]
        %v699 = vld [vmem:[%s561 + $0xf8] sm:$0xf]
        %v700 = vld [vmem:[%s561 + $0xfc] sm:$0xf]
        %v701 = vld [vmem:[%s561 + $0x100] sm:$0xf]
        %v702 = vld [vmem:[%s561 + $0x104] sm:$0xf]
        %v703 = vld [vmem:[%s561 + $0x108] sm:$0xf]
        %v704 = vld [vmem:[%s561 + $0x10c] sm:$0xf]
        %v705 = vld [vmem:[%s561 + $0x110] sm:$0xf]
        %v706 = vld [vmem:[%s561 + $0x114] sm:$0xf]
        %v707 = vld [vmem:[%s561 + $0x118] sm:$0xf]
        %v708 = vld [vmem:[%s561 + $0x11c] sm:$0xf]
        %v709 = vld [vmem:[%s561 + $0x120] sm:$0xf]
        %v710 = vld [vmem:[%s561 + $0x124] sm:$0xf]
        %v711 = vld [vmem:[%s561 + $0x128] sm:$0xf]
        %v712 = vld [vmem:[%s561 + $0x12c] sm:$0xf]
        %v713 = vld [vmem:[%s561 + $0x130] sm:$0xf]
        %v714 = vld [vmem:[%s561 + $0x134] sm:$0xf]
        %v715 = vld [vmem:[%s561 + $0x138] sm:$0xf]
        %v716 = vld [vmem:[%s561 + $0x13c] sm:$0xf]
        %v717 = vld [vmem:[%s564] sm:$0x1]
        %v719 = vlaneseq
        %v720 = vshrl.u32 %v719, 7
        %v721 = vsub.s32 0, %v720
        %v722 = vrot.slane %v717, %v721
        %v804 = vunpack.c.l.b16 %v637
        %v805 = vunpack.c.l.b16 %v638
        %v806 = vunpack.c.l.b16 %v639
        %v807 = vunpack.c.l.b16 %v640
        %v808 = vunpack.c.l.b16 %v641
        %v809 = vunpack.c.l.b16 %v642
        %v810 = vunpack.c.l.b16 %v643
        %v811 = vunpack.c.l.b16 %v644
        %v812 = vunpack.c.l.b16 %v645
        %v813 = vunpack.c.l.b16 %v646
        %v814 = vunpack.c.l.b16 %v647
        %v815 = vunpack.c.l.b16 %v648
        %v816 = vunpack.c.l.b16 %v649
        %v817 = vunpack.c.l.b16 %v650
        %v818 = vunpack.c.l.b16 %v651
        %v819 = vunpack.c.l.b16 %v652
        %v820 = vunpack.c.l.b16 %v653
        %v821 = vunpack.c.l.b16 %v654
        %v822 = vunpack.c.l.b16 %v655
        %v823 = vunpack.c.l.b16 %v656
        %v824 = vunpack.c.l.b16 %v657
        %v825 = vunpack.c.l.b16 %v658
        %v826 = vunpack.c.l.b16 %v659
        %v827 = vunpack.c.l.b16 %v660
        %v828 = vunpack.c.l.b16 %v661
        %v829 = vunpack.c.l.b16 %v662
        %v830 = vunpack.c.l.b16 %v663
        %v831 = vunpack.c.l.b16 %v664
        %v832 = vunpack.c.l.b16 %v665
        %v833 = vunpack.c.l.b16 %v666
        %v834 = vunpack.c.l.b16 %v667
        %v835 = vunpack.c.l.b16 %v668
        %v836 = vunpack.c.l.b16 %v669
        %v837 = vunpack.c.l.b16 %v670
        %v838 = vunpack.c.l.b16 %v671
        %v839 = vunpack.c.l.b16 %v672
        %v840 = vunpack.c.l.b16 %v673
        %v841 = vunpack.c.l.b16 %v674
        %v842 = vunpack.c.l.b16 %v675
        %v843 = vunpack.c.l.b16 %v676
        %v844 = vunpack.c.l.b16 %v677
        %v845 = vunpack.c.l.b16 %v678
        %v846 = vunpack.c.l.b16 %v679
        %v847 = vunpack.c.l.b16 %v680
        %v848 = vunpack.c.l.b16 %v681
        %v849 = vunpack.c.l.b16 %v682
        %v850 = vunpack.c.l.b16 %v683
        %v851 = vunpack.c.l.b16 %v684
        %v852 = vunpack.c.l.b16 %v685
        %v853 = vunpack.c.l.b16 %v686
        %v854 = vunpack.c.l.b16 %v687
        %v855 = vunpack.c.l.b16 %v688
        %v856 = vunpack.c.l.b16 %v689
        %v857 = vunpack.c.l.b16 %v690
        %v858 = vunpack.c.l.b16 %v691
        %v859 = vunpack.c.l.b16 %v692
        %v860 = vunpack.c.l.b16 %v693
        %v861 = vunpack.c.l.b16 %v694
        %v862 = vunpack.c.l.b16 %v695
        %v863 = vunpack.c.l.b16 %v696
        %v864 = vunpack.c.l.b16 %v697
        %v865 = vunpack.c.l.b16 %v698
        %v866 = vunpack.c.l.b16 %v699
        %v867 = vunpack.c.l.b16 %v700
        %v868 = vunpack.c.l.b16 %v701
        %v869 = vunpack.c.l.b16 %v702
        %v870 = vunpack.c.l.b16 %v703
        %v871 = vunpack.c.l.b16 %v704
        %v872 = vunpack.c.l.b16 %v705
        %v873 = vunpack.c.l.b16 %v706
        %v874 = vunpack.c.l.b16 %v707
        %v875 = vunpack.c.l.b16 %v708
        %v876 = vunpack.c.l.b16 %v709
        %v877 = vunpack.c.l.b16 %v710
        %v878 = vunpack.c.l.b16 %v711
        %v879 = vunpack.c.l.b16 %v712
        %v880 = vunpack.c.l.b16 %v713
        %v881 = vunpack.c.l.b16 %v714
        %v882 = vunpack.c.l.b16 %v715
        %v883 = vunpack.c.l.b16 %v716
        %v884 = vpack.c.b16 %v805, %v804
        %v885 = vpack.c.b16 %v807, %v806
        %v886 = vpack.c.b16 %v809, %v808
        %v887 = vpack.c.b16 %v811, %v810
        %v888 = vpack.c.b16 %v813, %v812
        %v889 = vpack.c.b16 %v815, %v814
        %v890 = vpack.c.b16 %v817, %v816
        %v891 = vpack.c.b16 %v819, %v818
        %v892 = vpack.c.b16 %v821, %v820
        %v893 = vpack.c.b16 %v823, %v822
        %v894 = vpack.c.b16 %v825, %v824
        %v895 = vpack.c.b16 %v827, %v826
        %v896 = vpack.c.b16 %v829, %v828
        %v897 = vpack.c.b16 %v831, %v830
        %v898 = vpack.c.b16 %v833, %v832
        %v899 = vpack.c.b16 %v835, %v834
        %v900 = vpack.c.b16 %v837, %v836
        %v901 = vpack.c.b16 %v839, %v838
        %v902 = vpack.c.b16 %v841, %v840
        %v903 = vpack.c.b16 %v843, %v842
        %v904 = vpack.c.b16 %v845, %v844
        %v905 = vpack.c.b16 %v847, %v846
        %v906 = vpack.c.b16 %v849, %v848
        %v907 = vpack.c.b16 %v851, %v850
        %v908 = vpack.c.b16 %v853, %v852
        %v909 = vpack.c.b16 %v855, %v854
        %v910 = vpack.c.b16 %v857, %v856
        %v911 = vpack.c.b16 %v859, %v858
        %v912 = vpack.c.b16 %v861, %v860
        %v913 = vpack.c.b16 %v863, %v862
        %v914 = vpack.c.b16 %v865, %v864
        %v915 = vpack.c.b16 %v867, %v866
        %v916 = vpack.c.b16 %v869, %v868
        %v917 = vpack.c.b16 %v871, %v870
        %v918 = vpack.c.b16 %v873, %v872
        %v919 = vpack.c.b16 %v875, %v874
        %v920 = vpack.c.b16 %v877, %v876
        %v921 = vpack.c.b16 %v879, %v878
        %v922 = vpack.c.b16 %v881, %v880
        %v923 = vpack.c.b16 %v883, %v882
        %964 = vmatprep.subr.bf16.mxu0 0
        %965 = vmatpush1.bf16.msra.mxu0 %v891
        %966 = vmatprep.subr.bf16.mxu0 0
        %967 = vmatpush1.bf16.msra.mxu0 %v890
        %968 = vmatprep.subr.bf16.mxu0 0
        %969 = vmatpush1.bf16.msra.mxu0 %v889
        %970 = vmatprep.subr.bf16.mxu0 0
        %971 = vmatpush1.bf16.msra.mxu0 %v888
        %972 = vmatprep.subr.bf16.mxu0 0
        %973 = vmatpush1.bf16.msra.mxu0 %v887
        %974 = vmatprep.subr.bf16.mxu0 0
        %975 = vmatpush1.bf16.msra.mxu0 %v886
        %976 = vmatprep.subr.bf16.mxu0 0
        %977 = vmatpush1.bf16.msra.mxu0 %v885
        %978 = vmatprep.subr.bf16.mxu0 0
        %979 = vmatpush1.bf16.msra.mxu0 %v884
        %980 = vmatprep.subr.bf16.mxu0 0
        %981 = vmatpush2.bf16.msra.mxu0 %v899
        %982 = vmatprep.subr.bf16.mxu0 0
        %983 = vmatpush2.bf16.msra.mxu0 %v898
        %984 = vmatprep.subr.bf16.mxu0 0
        %985 = vmatpush2.bf16.msra.mxu0 %v897
        %986 = vmatprep.subr.bf16.mxu0 0
        %987 = vmatpush2.bf16.msra.mxu0 %v896
        %988 = vmatprep.subr.bf16.mxu0 0
        %989 = vmatpush2.bf16.msra.mxu0 %v895
        %990 = vmatprep.subr.bf16.mxu0 0
        %991 = vmatpush2.bf16.msra.mxu0 %v894
        %992 = vmatprep.subr.bf16.mxu0 0
        %993 = vmatpush2.bf16.msra.mxu0 %v893
        %994 = vmatprep.subr.bf16.mxu0 0
        %995 = vmatpush2.bf16.msra.mxu0 %v892
        %996 = vmatprep.mubr.bf16.mxu0 %v628
        %997 = vmatmul.mubr.bf16.gmra.mxu0 %v627
        %v998 = vpop.f32.mrf.mxu0
        %v999 = vadd.f32 %v722, %v998
        %v1000 = vpop.f32.mrf.mxu0
        %v1001 = vpop.f32.mrf.mxu0
        %v1002 = vadd.f32 %v722, %v1001
        %v1003 = vpop.f32.mrf.mxu0
        %1004 = vmatprep.mubr.bf16.mxu0 %v633
        %1005 = vmatmul.mubr.bf16.gmra.mxu0 %v632
        %v1006 = vpop.f32.mrf.mxu0
        %v1007 = vadd.f32 %v722, %v1006
        %v1008 = vpop.f32.mrf.mxu0
        %v1009 = vpop.f32.mrf.mxu0
        %v1010 = vadd.f32 %v722, %v1009
        %v1011 = vpop.f32.mrf.mxu0
        %1012 = vdwg.mxu0
        %1013 = vmatprep.subr.bf16.mxu0 0
        %1014 = vmatpush1.bf16.msra.mxu0 %v907
        %1015 = vmatprep.subr.bf16.mxu0 0
        %1016 = vmatpush1.bf16.msra.mxu0 %v906
        %1017 = vmatprep.subr.bf16.mxu0 0
        %1018 = vmatpush1.bf16.msra.mxu0 %v905
        %1019 = vmatprep.subr.bf16.mxu0 0
        %1020 = vmatpush1.bf16.msra.mxu0 %v904
        %1021 = vmatprep.subr.bf16.mxu0 0
        %1022 = vmatpush1.bf16.msra.mxu0 %v903
        %1023 = vmatprep.subr.bf16.mxu0 0
        %1024 = vmatpush1.bf16.msra.mxu0 %v902
        %1025 = vmatprep.subr.bf16.mxu0 0
        %1026 = vmatpush1.bf16.msra.mxu0 %v901
        %1027 = vmatprep.subr.bf16.mxu0 0
        %1028 = vmatpush1.bf16.msra.mxu0 %v900
        %1029 = vmatprep.subr.bf16.mxu0 0
        %1030 = vmatpush2.bf16.msra.mxu0 %v915
        %1031 = vmatprep.subr.bf16.mxu0 0
        %1032 = vmatpush2.bf16.msra.mxu0 %v914
        %1033 = vmatprep.subr.bf16.mxu0 0
        %1034 = vmatpush2.bf16.msra.mxu0 %v913
        %1035 = vmatprep.subr.bf16.mxu0 0
        %1036 = vmatpush2.bf16.msra.mxu0 %v912
        %1037 = vmatprep.subr.bf16.mxu0 0
        %1038 = vmatpush2.bf16.msra.mxu0 %v911
        %1039 = vmatprep.subr.bf16.mxu0 0
        %1040 = vmatpush2.bf16.msra.mxu0 %v910
        %1041 = vmatprep.subr.bf16.mxu0 0
        %1042 = vmatpush2.bf16.msra.mxu0 %v909
        %1043 = vmatprep.subr.bf16.mxu0 0
        %1044 = vmatpush2.bf16.msra.mxu0 %v908
        %1045 = vmatprep.mubr.bf16.mxu0 %v630
        %1046 = vmatmul.mubr.bf16.gmra.mxu0 %v629
        %v1047 = vpop.f32.mrf.mxu0
        %v1048 = vadd.f32 %v999, %v1047
        %v1049 = vpop.f32.mrf.mxu0
        %v1050 = vpop.f32.mrf.mxu0
        %v1051 = vadd.f32 %v1002, %v1050
        %v1052 = vpop.f32.mrf.mxu0
        %1053 = vmatprep.mubr.bf16.mxu0 %v635
        %1054 = vmatmul.mubr.bf16.gmra.mxu0 %v634
        %v1055 = vpop.f32.mrf.mxu0
        %v1056 = vadd.f32 %v1007, %v1055
        %v1057 = vpop.f32.mrf.mxu0
        %v1058 = vpop.f32.mrf.mxu0
        %v1059 = vadd.f32 %v1010, %v1058
        %v1060 = vpop.f32.mrf.mxu0
        %1061 = vdwg.mxu0
        %1062 = vmatprep.subr.bf16.mxu0 0
        %1063 = vmatpush1.bf16.msra.mxu0 %v923
        %1064 = vmatprep.subr.bf16.mxu0 0
        %1065 = vmatpush1.bf16.msra.mxu0 %v922
        %1066 = vmatprep.subr.bf16.mxu0 0
        %1067 = vmatpush1.bf16.msra.mxu0 %v921
        %1068 = vmatprep.subr.bf16.mxu0 0
        %1069 = vmatpush1.bf16.msra.mxu0 %v920
        %1070 = vmatprep.subr.bf16.mxu0 0
        %1071 = vmatpush1.bf16.msra.mxu0 %v919
        %1072 = vmatprep.subr.bf16.mxu0 0
        %1073 = vmatpush1.bf16.msra.mxu0 %v918
        %1074 = vmatprep.subr.bf16.mxu0 0
        %1075 = vmatpush1.bf16.msra.mxu0 %v917
        %1076 = vmatprep.subr.bf16.mxu0 0
        %1077 = vmatpush1.bf16.msra.mxu0 %v916
        %1078 = vmatprep.subr.bf16.mxu0 0
        %1079 = vmatpush2.bf16.msra.mxu0 0
        %1080 = vmatprep.subr.bf16.mxu0 0
        %1081 = vmatpush2.bf16.msra.mxu0 0
        %1082 = vmatprep.subr.bf16.mxu0 0
        %1083 = vmatpush2.bf16.msra.mxu0 0
        %1084 = vmatprep.subr.bf16.mxu0 0
        %1085 = vmatpush2.bf16.msra.mxu0 0
        %1086 = vmatprep.subr.bf16.mxu0 0
        %1087 = vmatpush2.bf16.msra.mxu0 0
        %1088 = vmatprep.subr.bf16.mxu0 0
        %1089 = vmatpush2.bf16.msra.mxu0 0
        %1090 = vmatprep.subr.bf16.mxu0 0
        %1091 = vmatpush2.bf16.msra.mxu0 0
        %1092 = vmatprep.subr.bf16.mxu0 0
        %1093 = vmatpush2.bf16.msra.mxu0 0
        %1094 = vmatprep.mubr.bf16.mxu0 0
        %1095 = vmatmul.mubr.bf16.gmra.mxu0 %v631
        %v1096 = vpop.f32.mrf.mxu0
        %v1097 = vadd.f32 %v1048, %v1096
        %v1098 = vpop.f32.mrf.mxu0
        %v1099 = vpop.f32.mrf.mxu0
        %v1100 = vadd.f32 %v1051, %v1099
        %v1101 = vpop.f32.mrf.mxu0
        %1102 = vmatprep.mubr.bf16.mxu0 0
        %1103 = vmatmul.mubr.bf16.gmra.mxu0 %v636
        %v1104 = vpop.f32.mrf.mxu0
        %v1105 = vadd.f32 %v1056, %v1104
        %v1106 = vpop.f32.mrf.mxu0
        %v1107 = vpop.f32.mrf.mxu0
        %v1108 = vadd.f32 %v1059, %v1107
        %v1109 = vpop.f32.mrf.mxu0
        %1110 = vdwg.mxu0
        %v1111 = vld [vmem:[%s578] sm:$0x3]
        %v1112 = vld [vmem:[%s574] sm:$0xf]
        %v1113 = vld [vmem:[%s574 + $0x4] sm:$0xf]
        %v1114 = vld [vmem:[%s574 + $0x8] sm:$0xf]
        %v1115 = vld [vmem:[%s574 + $0xc] sm:$0xf]
        %v1116 = vld [vmem:[%s574 + $0x10] sm:$0xf]
        %v1117 = vld [vmem:[%s574 + $0x14] sm:$0xf]
        %v1118 = vld [vmem:[%s574 + $0x18] sm:$0xf]
        %v1119 = vld [vmem:[%s574 + $0x1c] sm:$0xf]
        %v1120 = vld [vmem:[%s569] sm:$0xff]
        %v1121 = vld [vmem:[%s569 + $0x8] sm:$0xff]
        %v1122 = vld [vmem:[%s569 + $0x10] sm:$0xff]
        %v1123 = vld [vmem:[%s569 + $0x18] sm:$0xff]
        %v1124 = vld [vmem:[%s569 + $0x20] sm:$0xff]
        %v1125 = vld [vmem:[%s569 + $0x28] sm:$0xff]
        %v1126 = vld [vmem:[%s569 + $0x30] sm:$0xff]
        %v1127 = vld [vmem:[%s569 + $0x38] sm:$0xff]
        %v1128 = vpack.c.bf16 %v1100, %v1097
        %v1129 = vpack.c.bf16 %v1108, %v1105
        %v1138 = vunpack.c.l.b16 %v1112
        %v1139 = vunpack.c.l.b16 %v1113
        %v1140 = vunpack.c.l.b16 %v1114
        %v1141 = vunpack.c.l.b16 %v1115
        %v1142 = vunpack.c.l.b16 %v1116
        %v1143 = vunpack.c.l.b16 %v1117
        %v1144 = vunpack.c.l.b16 %v1118
        %v1145 = vunpack.c.l.b16 %v1119
        %v1146 = vpack.c.b16 %v1139, %v1138
        %v1147 = vpack.c.b16 %v1141, %v1140
        %v1148 = vpack.c.b16 %v1143, %v1142
        %v1149 = vpack.c.b16 %v1145, %v1144
        %vm1150 = vcmask 130048
        %v1152 = vsel %vm1150, %v1128, 0
        %v1155 = vsel %vm1150, %v1129, 0
        %v1158 = vsel %vm1150, %v1146, 0
        %v1161 = vsel %vm1150, %v1147, 0
        %v1164 = vsel %vm1150, %v1148, 0
        %v1167 = vsel %vm1150, %v1149, 0
        %1169 = vmatprep.subr.bf16.mxu0 0
        %1170 = vmatpush1.bf16.xpose.msra.mxu0 0
        %1171 = vmatprep.subr.bf16.mxu0 0
        %1172 = vmatpush1.bf16.xpose.msra.mxu0 0
        %1173 = vmatprep.subr.bf16.mxu0 0
        %1174 = vmatpush1.bf16.xpose.msra.mxu0 0
        %1175 = vmatprep.subr.bf16.mxu0 0
        %1176 = vmatpush1.bf16.xpose.msra.mxu0 0
        %1177 = vmatprep.subr.bf16.mxu0 0
        %1178 = vmatpush1.bf16.xpose.msra.mxu0 %v1167
        %1179 = vmatprep.subr.bf16.mxu0 0
        %1180 = vmatpush1.bf16.xpose.msra.mxu0 %v1164
        %1181 = vmatprep.subr.bf16.mxu0 0
        %1182 = vmatpush1.bf16.xpose.msra.mxu0 %v1161
        %1183 = vmatprep.subr.bf16.mxu0 0
        %1184 = vmatpush1.bf16.xpose.msra.mxu0 %v1158
        %1185 = vmatprep.subr.bf16.mxu0 0
        %1186 = vmatpush2.bf16.xpose.msra.mxu0 0
        %1187 = vmatprep.subr.bf16.mxu0 0
        %1188 = vmatpush2.bf16.xpose.msra.mxu0 0
        %1189 = vmatprep.subr.bf16.mxu0 0
        %1190 = vmatpush2.bf16.xpose.msra.mxu0 0
        %1191 = vmatprep.subr.bf16.mxu0 0
        %1192 = vmatpush2.bf16.xpose.msra.mxu0 0
        %1193 = vmatprep.subr.bf16.mxu0 0
        %1194 = vmatpush2.bf16.xpose.msra.mxu0 0
        %1195 = vmatprep.subr.bf16.mxu0 0
        %1196 = vmatpush2.bf16.xpose.msra.mxu0 0
        %1197 = vmatprep.subr.bf16.mxu0 0
        %1198 = vmatpush2.bf16.xpose.msra.mxu0 0
        %1199 = vmatprep.subr.bf16.mxu0 0
        %1200 = vmatpush2.bf16.xpose.msra.mxu0 0
        %1201 = vmatprep.mubr.bf16.mxu0 0
        %1202 = vmatmul.mubr.bf16.gmra.mxu0 %v1152
        %v1203 = vpop.f32.mrf.mxu0
        %v1204 = vadd.f32 0.0, %v1203
        %v1205 = vpop.f32.mrf.mxu0
        %v1206 = vpop.f32.mrf.mxu0
        %v1207 = vadd.f32 0.0, %v1206
        %v1208 = vpop.f32.mrf.mxu0
        %1209 = vmatprep.mubr.bf16.mxu0 0
        %1210 = vmatmul.mubr.bf16.gmra.mxu0 %v1155
        %v1211 = vpop.f32.mrf.mxu0
        %v1212 = vadd.f32 0.0, %v1211
        %v1213 = vpop.f32.mrf.mxu0
        %v1214 = vpop.f32.mrf.mxu0
        %v1215 = vadd.f32 0.0, %v1214
        %v1216 = vpop.f32.mrf.mxu0
        %1217 = vdwg.mxu0
        %v1218 = vmul.f32 %v1204, 2.0
        %v1219 = vmul.f32 %v1207, 2.0
        %v1220 = vmul.f32 %v1212, 2.0
        %v1221 = vmul.f32 %v1215, 2.0
        %v1222 = vlaneseq
        %v1223 = vshrl.u32 %v1222, 7
        %v1224 = vsub.s32 0, %v1223
        %v1225 = vrot.slane %v1111, %v1224
        %v1226 = vsub.f32 %v1225, %v1218
        %v1227 = vsub.f32 %v1225, %v1219
        %v1228 = vsub.f32 %v1225, %v1220
        %v1229 = vsub.f32 %v1225, %v1221
        %vm1230 = vcmask 523264
        %v1231 = vsel %vm1230, %v1226, inf
        %1232 = vmin.index.xlane.f32.xlu0 %v1231
        %v1233 = vpop.xlane.xlu0 %1232
        %v1234 = vsel %vm1230, %v1227, inf
        %1235 = vmin.index.xlane.f32.xlu0 %v1234
        %v1236 = vpop.xlane.xlu0 %1235
        %v1237 = vsel %vm1230, %v1228, inf
        %1238 = vmin.index.xlane.f32.xlu0 %v1237
        %v1239 = vpop.xlane.xlu0 %1238
        %v1240 = vsel %vm1230, %v1229, inf
        %1241 = vmin.index.xlane.f32.xlu0 %v1240
        %v1242 = vpop.xlane.xlu0 %1241
        %v1243 = vlaneseq
        %v1244 = vand.u32 %v1243, 127
        %vm1245 = vcmp.eq.s32.totalorder %v1244, %v1233
        %vm1246 = vcmp.eq.s32.totalorder %v1244, %v1236
        %vm1247 = vcmp.eq.s32.totalorder %v1244, %v1239
        %vm1248 = vcmp.eq.s32.totalorder %v1244, %v1242
        %v1249 = vsel %vm1245, 1, 0
        %v1250 = vsel %vm1246, 1, 0
        %v1251 = vsel %vm1247, 1, 0
        %v1252 = vsel %vm1248, 1, 0
        %v1253 = vcvt.s32.f32 %v1249
        %v1254 = vcvt.s32.f32 %v1250
        %v1255 = vcvt.s32.f32 %v1251
        %v1256 = vcvt.s32.f32 %v1252
        %v1258 = vsel %vm1230, %v1253, 0
        %v1261 = vsel %vm1230, %v1254, 0
        %v1264 = vsel %vm1230, %v1255, 0
        %v1267 = vsel %vm1230, %v1256, 0
        %1269 = vmatprep.subr.mxu0 0.0
        %1270 = vmatpush1.msra.mxu0 0.0
        %1271 = vmatprep.subr.mxu0 0.0
        %1272 = vmatpush1.msra.mxu0 0.0
        %1273 = vmatprep.subr.mxu0 0.0
        %1274 = vmatpush1.msra.mxu0 0.0
        %1275 = vmatprep.subr.mxu0 0.0
        %1276 = vmatpush1.msra.mxu0 0.0
        %1277 = vmatprep.subr.mxu0 0.0
        %1278 = vmatpush1.msra.mxu0 0.0
        %1279 = vmatprep.subr.mxu0 0.0
        %1280 = vmatpush1.msra.mxu0 0.0
        %1281 = vmatprep.subr.mxu0 0.0
        %1282 = vmatpush1.msra.mxu0 0.0
        %1283 = vmatprep.subr.mxu0 0.0
        %1284 = vmatpush1.msra.mxu0 0.0
        %1285 = vmatprep.subr.mxu0 0.0
        %1286 = vmatpush1.msra.mxu0 %v1127
        %1287 = vmatprep.subr.mxu0 0.0
        %1288 = vmatpush1.msra.mxu0 %v1126
        %1289 = vmatprep.subr.mxu0 0.0
        %1290 = vmatpush1.msra.mxu0 %v1125
        %1291 = vmatprep.subr.mxu0 0.0
        %1292 = vmatpush1.msra.mxu0 %v1124
        %1293 = vmatprep.subr.mxu0 0.0
        %1294 = vmatpush1.msra.mxu0 %v1123
        %1295 = vmatprep.subr.mxu0 0.0
        %1296 = vmatpush1.msra.mxu0 %v1122
        %1297 = vmatprep.subr.mxu0 0.0
        %1298 = vmatpush1.msra.mxu0 %v1121
        %1299 = vmatprep.subr.mxu0 0.0
        %1300 = vmatpush1.msra.mxu0 %v1120
        %1301 = vmatprep.subr.mxu0 0.0
        %1302 = vmatpush2.msra.mxu0 0.0
        %1303 = vmatprep.subr.mxu0 0.0
        %1304 = vmatpush2.msra.mxu0 0.0
        %1305 = vmatprep.subr.mxu0 0.0
        %1306 = vmatpush2.msra.mxu0 0.0
        %1307 = vmatprep.subr.mxu0 0.0
        %1308 = vmatpush2.msra.mxu0 0.0
        %1309 = vmatprep.subr.mxu0 0.0
        %1310 = vmatpush2.msra.mxu0 0.0
        %1311 = vmatprep.subr.mxu0 0.0
        %1312 = vmatpush2.msra.mxu0 0.0
        %1313 = vmatprep.subr.mxu0 0.0
        %1314 = vmatpush2.msra.mxu0 0.0
        %1315 = vmatprep.subr.mxu0 0.0
        %1316 = vmatpush2.msra.mxu0 0.0
        %1317 = vmatprep.subr.mxu0 0.0
        %1318 = vmatpush2.msra.mxu0 0.0
        %1319 = vmatprep.subr.mxu0 0.0
        %1320 = vmatpush2.msra.mxu0 0.0
        %1321 = vmatprep.subr.mxu0 0.0
        %1322 = vmatpush2.msra.mxu0 0.0
        %1323 = vmatprep.subr.mxu0 0.0
        %1324 = vmatpush2.msra.mxu0 0.0
        %1325 = vmatprep.subr.mxu0 0.0
        %1326 = vmatpush2.msra.mxu0 0.0
        %1327 = vmatprep.subr.mxu0 0.0
        %1328 = vmatpush2.msra.mxu0 0.0
        %1329 = vmatprep.subr.mxu0 0.0
        %1330 = vmatpush2.msra.mxu0 0.0
        %1331 = vmatprep.subr.mxu0 0.0
        %1332 = vmatpush2.msra.mxu0 0.0
        %1333 = vmatprep.mubr.f32.mxu0 0.0
        %1334 = vmatmul.mubr.f32.gmra.mxu0 %v1258
        %v1335 = vpop.f32.mrf.mxu0
        %v1336 = vadd.f32 0.0, %v1335
        %v1337 = vpop.f32.mrf.mxu0
        %1338 = vmatprep.mubr.f32.mxu0 0.0
        %1339 = vmatmul.mubr.f32.gmra.mxu0 %v1261
        %v1340 = vpop.f32.mrf.mxu0
        %v1341 = vadd.f32 0.0, %v1340
        %v1342 = vpop.f32.mrf.mxu0
        %1343 = vmatprep.mubr.f32.mxu0 0.0
        %1344 = vmatmul.mubr.f32.gmra.mxu0 %v1264
        %v1345 = vpop.f32.mrf.mxu0
        %v1346 = vadd.f32 0.0, %v1345
        %v1347 = vpop.f32.mrf.mxu0
        %1348 = vmatprep.mubr.f32.mxu0 0.0
        %1349 = vmatmul.mubr.f32.gmra.mxu0 %v1267
        %v1350 = vpop.f32.mrf.mxu0
        %v1351 = vadd.f32 0.0, %v1350
        %v1352 = vpop.f32.mrf.mxu0
        %1353 = vdwg.mxu0
        %v1354 = vsub.f32 %v1336, %v1097
        %v1355 = vsub.f32 %v1341, %v1100
        %v1356 = vsub.f32 %v1346, %v1105
        %v1357 = vsub.f32 %v1351, %v1108
        %v1358 = vmul.f32 %v1354, %v1354
        %v1359 = vmul.f32 %v1355, %v1355
        %v1360 = vmul.f32 %v1356, %v1356
        %v1361 = vmul.f32 %v1357, %v1357
        %v1362 = vsel %vm1150, %v1358, 0.0
        %1363 = vadd.xlane.f32.xlu0 %v1362
        %v1364 = vpop.xlane.xlu0 %1363
        %v1365 = vsel %vm1150, %v1359, 0.0
        %1366 = vadd.xlane.f32.xlu0 %v1365
        %v1367 = vpop.xlane.xlu0 %1366
        %v1368 = vsel %vm1150, %v1360, 0.0
        %1369 = vadd.xlane.f32.xlu0 %v1368
        %v1370 = vpop.xlane.xlu0 %1369
        %v1371 = vsel %vm1150, %v1361, 0.0
        %1372 = vadd.xlane.f32.xlu0 %v1371
        %v1373 = vpop.xlane.xlu0 %1372
        %v1374 = vadd.f32 %v1364, %v1367
        %v1375 = vadd.f32 %v1374, %v1370
        %v1376 = vadd.f32 %v1375, %v1373
        %v1377 = vrot.slane %v1376, 4
        %v1378 = vadd.f32 %v1376, %v1377
        %v1379 = vrot.slane %v1378, 2
        %v1380 = vadd.f32 %v1378, %v1379
        %v1381 = vrot.slane %v1380, 1
        %v1382 = vadd.f32 %v1380, %v1381
        %v1383 = vsub.f32 %v1097, %v1336
        %v1384 = vsub.f32 %v1100, %v1341
        %v1385 = vsub.f32 %v1105, %v1346
        %v1386 = vsub.f32 %v1108, %v1351
        %v1387 = vadd.f32 %v1336, 0.0
        %v1388 = vadd.f32 %v1341, 0.0
        %v1389 = vadd.f32 %v1346, 0.0
        %v1390 = vadd.f32 %v1351, 0.0
        %s1391 = scalar_lea.vmem %s574, 32
        %v1392 = vld [vmem:[%s1391] sm:$0xf]
        %v1393 = vld [vmem:[%s1391 + $0x4] sm:$0xf]
        %v1394 = vld [vmem:[%s1391 + $0x8] sm:$0xf]
        %v1395 = vld [vmem:[%s1391 + $0xc] sm:$0xf]
        %v1396 = vld [vmem:[%s1391 + $0x10] sm:$0xf]
        %v1397 = vld [vmem:[%s1391 + $0x14] sm:$0xf]
        %v1398 = vld [vmem:[%s1391 + $0x18] sm:$0xf]
        %v1399 = vld [vmem:[%s1391 + $0x1c] sm:$0xf]
        %s1400 = scalar_lea.vmem %s569, 64
        %v1401 = vld [vmem:[%s1400] sm:$0xff]
        %v1402 = vld [vmem:[%s1400 + $0x8] sm:$0xff]
        %v1403 = vld [vmem:[%s1400 + $0x10] sm:$0xff]
        %v1404 = vld [vmem:[%s1400 + $0x18] sm:$0xff]
        %v1405 = vld [vmem:[%s1400 + $0x20] sm:$0xff]
        %v1406 = vld [vmem:[%s1400 + $0x28] sm:$0xff]
        %v1407 = vld [vmem:[%s1400 + $0x30] sm:$0xff]
        %v1408 = vld [vmem:[%s1400 + $0x38] sm:$0xff]
        %v1409 = vpack.c.bf16 %v1384, %v1383
        %v1410 = vpack.c.bf16 %v1386, %v1385
        %v1419 = vunpack.c.l.b16 %v1392
        %v1420 = vunpack.c.l.b16 %v1393
        %v1421 = vunpack.c.l.b16 %v1394
        %v1422 = vunpack.c.l.b16 %v1395
        %v1423 = vunpack.c.l.b16 %v1396
        %v1424 = vunpack.c.l.b16 %v1397
        %v1425 = vunpack.c.l.b16 %v1398
        %v1426 = vunpack.c.l.b16 %v1399
        %v1427 = vpack.c.b16 %v1420, %v1419
        %v1428 = vpack.c.b16 %v1422, %v1421
        %v1429 = vpack.c.b16 %v1424, %v1423
        %v1430 = vpack.c.b16 %v1426, %v1425
        %v1432 = vsel %vm1150, %v1409, 0
        %v1435 = vsel %vm1150, %v1410, 0
        %v1438 = vsel %vm1150, %v1427, 0
        %v1441 = vsel %vm1150, %v1428, 0
        %v1444 = vsel %vm1150, %v1429, 0
        %v1447 = vsel %vm1150, %v1430, 0
        %1449 = vmatprep.subr.bf16.mxu0 0
        %1450 = vmatpush1.bf16.xpose.msra.mxu0 0
        %1451 = vmatprep.subr.bf16.mxu0 0
        %1452 = vmatpush1.bf16.xpose.msra.mxu0 0
        %1453 = vmatprep.subr.bf16.mxu0 0
        %1454 = vmatpush1.bf16.xpose.msra.mxu0 0
        %1455 = vmatprep.subr.bf16.mxu0 0
        %1456 = vmatpush1.bf16.xpose.msra.mxu0 0
        %1457 = vmatprep.subr.bf16.mxu0 0
        %1458 = vmatpush1.bf16.xpose.msra.mxu0 %v1447
        %1459 = vmatprep.subr.bf16.mxu0 0
        %1460 = vmatpush1.bf16.xpose.msra.mxu0 %v1444
        %1461 = vmatprep.subr.bf16.mxu0 0
        %1462 = vmatpush1.bf16.xpose.msra.mxu0 %v1441
        %1463 = vmatprep.subr.bf16.mxu0 0
        %1464 = vmatpush1.bf16.xpose.msra.mxu0 %v1438
        %1465 = vmatprep.subr.bf16.mxu0 0
        %1466 = vmatpush2.bf16.xpose.msra.mxu0 0
        %1467 = vmatprep.subr.bf16.mxu0 0
        %1468 = vmatpush2.bf16.xpose.msra.mxu0 0
        %1469 = vmatprep.subr.bf16.mxu0 0
        %1470 = vmatpush2.bf16.xpose.msra.mxu0 0
        %1471 = vmatprep.subr.bf16.mxu0 0
        %1472 = vmatpush2.bf16.xpose.msra.mxu0 0
        %1473 = vmatprep.subr.bf16.mxu0 0
        %1474 = vmatpush2.bf16.xpose.msra.mxu0 0
        %1475 = vmatprep.subr.bf16.mxu0 0
        %1476 = vmatpush2.bf16.xpose.msra.mxu0 0
        %1477 = vmatprep.subr.bf16.mxu0 0
        %1478 = vmatpush2.bf16.xpose.msra.mxu0 0
        %1479 = vmatprep.subr.bf16.mxu0 0
        %1480 = vmatpush2.bf16.xpose.msra.mxu0 0
        %1481 = vmatprep.mubr.bf16.mxu0 0
        %1482 = vmatmul.mubr.bf16.gmra.mxu0 %v1432
        %v1483 = vpop.f32.mrf.mxu0
        %v1484 = vadd.f32 0.0, %v1483
        %v1485 = vpop.f32.mrf.mxu0
        %v1486 = vpop.f32.mrf.mxu0
        %v1487 = vadd.f32 0.0, %v1486
        %v1488 = vpop.f32.mrf.mxu0
        %1489 = vmatprep.mubr.bf16.mxu0 0
        %1490 = vmatmul.mubr.bf16.gmra.mxu0 %v1435
        %v1491 = vpop.f32.mrf.mxu0
        %v1492 = vadd.f32 0.0, %v1491
        %v1493 = vpop.f32.mrf.mxu0
        %v1494 = vpop.f32.mrf.mxu0
        %v1495 = vadd.f32 0.0, %v1494
        %v1496 = vpop.f32.mrf.mxu0
        %1497 = vdwg.mxu0
        %v1498 = vmul.f32 %v1484, 2.0
        %v1499 = vmul.f32 %v1487, 2.0
        %v1500 = vmul.f32 %v1492, 2.0
        %v1501 = vmul.f32 %v1495, 2.0
        %v1502 = vlaneseq
        %v1503 = vshrl.u32 %v1502, 7
        %v1504 = vsub.s32 1, %v1503
        %v1505 = vrot.slane %v1111, %v1504
        %v1506 = vsub.f32 %v1505, %v1498
        %v1507 = vsub.f32 %v1505, %v1499
        %v1508 = vsub.f32 %v1505, %v1500
        %v1509 = vsub.f32 %v1505, %v1501
        %v1510 = vsel %vm1230, %v1506, inf
        %1511 = vmin.index.xlane.f32.xlu0 %v1510
        %v1512 = vpop.xlane.xlu0 %1511
        %v1513 = vsel %vm1230, %v1507, inf
        %1514 = vmin.index.xlane.f32.xlu0 %v1513
        %v1515 = vpop.xlane.xlu0 %1514
        %v1516 = vsel %vm1230, %v1508, inf
        %1517 = vmin.index.xlane.f32.xlu0 %v1516
        %v1518 = vpop.xlane.xlu0 %1517
        %v1519 = vsel %vm1230, %v1509, inf
        %1520 = vmin.index.xlane.f32.xlu0 %v1519
        %v1521 = vpop.xlane.xlu0 %1520
        %vm1522 = vcmp.eq.s32.totalorder %v1244, %v1512
        %vm1523 = vcmp.eq.s32.totalorder %v1244, %v1515
        %vm1524 = vcmp.eq.s32.totalorder %v1244, %v1518
        %vm1525 = vcmp.eq.s32.totalorder %v1244, %v1521
        %v1526 = vsel %vm1522, 1, 0
        %v1527 = vsel %vm1523, 1, 0
        %v1528 = vsel %vm1524, 1, 0
        %v1529 = vsel %vm1525, 1, 0
        %v1530 = vcvt.s32.f32 %v1526
        %v1531 = vcvt.s32.f32 %v1527
        %v1532 = vcvt.s32.f32 %v1528
        %v1533 = vcvt.s32.f32 %v1529
        %v1535 = vsel %vm1230, %v1530, 0
        %v1538 = vsel %vm1230, %v1531, 0
        %v1541 = vsel %vm1230, %v1532, 0
        %v1544 = vsel %vm1230, %v1533, 0
        %1546 = vmatprep.subr.mxu0 0.0
        %1547 = vmatpush1.msra.mxu0 0.0
        %1548 = vmatprep.subr.mxu0 0.0
        %1549 = vmatpush1.msra.mxu0 0.0
        %1550 = vmatprep.subr.mxu0 0.0
        %1551 = vmatpush1.msra.mxu0 0.0
        %1552 = vmatprep.subr.mxu0 0.0
        %1553 = vmatpush1.msra.mxu0 0.0
        %1554 = vmatprep.subr.mxu0 0.0
        %1555 = vmatpush1.msra.mxu0 0.0
        %1556 = vmatprep.subr.mxu0 0.0
        %1557 = vmatpush1.msra.mxu0 0.0
        %1558 = vmatprep.subr.mxu0 0.0
        %1559 = vmatpush1.msra.mxu0 0.0
        %1560 = vmatprep.subr.mxu0 0.0
        %1561 = vmatpush1.msra.mxu0 0.0
        %1562 = vmatprep.subr.mxu0 0.0
        %1563 = vmatpush1.msra.mxu0 %v1408
        %1564 = vmatprep.subr.mxu0 0.0
        %1565 = vmatpush1.msra.mxu0 %v1407
        %1566 = vmatprep.subr.mxu0 0.0
        %1567 = vmatpush1.msra.mxu0 %v1406
        %1568 = vmatprep.subr.mxu0 0.0
        %1569 = vmatpush1.msra.mxu0 %v1405
        %1570 = vmatprep.subr.mxu0 0.0
        %1571 = vmatpush1.msra.mxu0 %v1404
        %1572 = vmatprep.subr.mxu0 0.0
        %1573 = vmatpush1.msra.mxu0 %v1403
        %1574 = vmatprep.subr.mxu0 0.0
        %1575 = vmatpush1.msra.mxu0 %v1402
        %1576 = vmatprep.subr.mxu0 0.0
        %1577 = vmatpush1.msra.mxu0 %v1401
        %1578 = vmatprep.subr.mxu0 0.0
        %1579 = vmatpush2.msra.mxu0 0.0
        %1580 = vmatprep.subr.mxu0 0.0
        %1581 = vmatpush2.msra.mxu0 0.0
        %1582 = vmatprep.subr.mxu0 0.0
        %1583 = vmatpush2.msra.mxu0 0.0
        %1584 = vmatprep.subr.mxu0 0.0
        %1585 = vmatpush2.msra.mxu0 0.0
        %1586 = vmatprep.subr.mxu0 0.0
        %1587 = vmatpush2.msra.mxu0 0.0
        %1588 = vmatprep.subr.mxu0 0.0
        %1589 = vmatpush2.msra.mxu0 0.0
        %1590 = vmatprep.subr.mxu0 0.0
        %1591 = vmatpush2.msra.mxu0 0.0
        %1592 = vmatprep.subr.mxu0 0.0
        %1593 = vmatpush2.msra.mxu0 0.0
        %1594 = vmatprep.subr.mxu0 0.0
        %1595 = vmatpush2.msra.mxu0 0.0
        %1596 = vmatprep.subr.mxu0 0.0
        %1597 = vmatpush2.msra.mxu0 0.0
        %1598 = vmatprep.subr.mxu0 0.0
        %1599 = vmatpush2.msra.mxu0 0.0
        %1600 = vmatprep.subr.mxu0 0.0
        %1601 = vmatpush2.msra.mxu0 0.0
        %1602 = vmatprep.subr.mxu0 0.0
        %1603 = vmatpush2.msra.mxu0 0.0
        %1604 = vmatprep.subr.mxu0 0.0
        %1605 = vmatpush2.msra.mxu0 0.0
        %1606 = vmatprep.subr.mxu0 0.0
        %1607 = vmatpush2.msra.mxu0 0.0
        %1608 = vmatprep.subr.mxu0 0.0
        %1609 = vmatpush2.msra.mxu0 0.0
        %1610 = vmatprep.mubr.f32.mxu0 0.0
        %1611 = vmatmul.mubr.f32.gmra.mxu0 %v1535
        %v1612 = vpop.f32.mrf.mxu0
        %v1613 = vadd.f32 0.0, %v1612
        %v1614 = vpop.f32.mrf.mxu0
        %1615 = vmatprep.mubr.f32.mxu0 0.0
        %1616 = vmatmul.mubr.f32.gmra.mxu0 %v1538
        %v1617 = vpop.f32.mrf.mxu0
        %v1618 = vadd.f32 0.0, %v1617
        %v1619 = vpop.f32.mrf.mxu0
        %1620 = vmatprep.mubr.f32.mxu0 0.0
        %1621 = vmatmul.mubr.f32.gmra.mxu0 %v1541
        %v1622 = vpop.f32.mrf.mxu0
        %v1623 = vadd.f32 0.0, %v1622
        %v1624 = vpop.f32.mrf.mxu0
        %1625 = vmatprep.mubr.f32.mxu0 0.0
        %1626 = vmatmul.mubr.f32.gmra.mxu0 %v1544
        %v1627 = vpop.f32.mrf.mxu0
        %v1628 = vadd.f32 0.0, %v1627
        %v1629 = vpop.f32.mrf.mxu0
        %1630 = vdwg.mxu0
        %v1631 = vsub.f32 %v1613, %v1383
        %v1632 = vsub.f32 %v1618, %v1384
        %v1633 = vsub.f32 %v1623, %v1385
        %v1634 = vsub.f32 %v1628, %v1386
        %v1635 = vmul.f32 %v1631, %v1631
        %v1636 = vmul.f32 %v1632, %v1632
        %v1637 = vmul.f32 %v1633, %v1633
        %v1638 = vmul.f32 %v1634, %v1634
        %v1639 = vsel %vm1150, %v1635, 0.0
        %1640 = vadd.xlane.f32.xlu0 %v1639
        %v1641 = vpop.xlane.xlu0 %1640
        %v1642 = vsel %vm1150, %v1636, 0.0
        %1643 = vadd.xlane.f32.xlu0 %v1642
        %v1644 = vpop.xlane.xlu0 %1643
        %v1645 = vsel %vm1150, %v1637, 0.0
        %1646 = vadd.xlane.f32.xlu0 %v1645
        %v1647 = vpop.xlane.xlu0 %1646
        %v1648 = vsel %vm1150, %v1638, 0.0
        %1649 = vadd.xlane.f32.xlu0 %v1648
        %v1650 = vpop.xlane.xlu0 %1649
        %v1651 = vadd.f32 %v1641, %v1644
        %v1652 = vadd.f32 %v1651, %v1647
        %v1653 = vadd.f32 %v1652, %v1650
        %v1654 = vrot.slane %v1653, 4
        %v1655 = vadd.f32 %v1653, %v1654
        %v1656 = vrot.slane %v1655, 2
        %v1657 = vadd.f32 %v1655, %v1656
        %v1658 = vrot.slane %v1657, 1
        %v1659 = vadd.f32 %v1657, %v1658
        %v1660 = vadd.f32 %v1387, %v1613
        %v1661 = vadd.f32 %v1388, %v1618
        %v1662 = vadd.f32 %v1389, %v1623
        %v1663 = vadd.f32 %v1390, %v1628
        %vm1664 = vcmask 7168
        %v1665 = vsel %vm1664, %v1233, %v1512
        %v1666 = vsel %vm1664, %v1236, %v1515
        %v1667 = vsel %vm1664, %v1239, %v1518
        %v1668 = vsel %vm1664, %v1242, %v1521
        %vm1669 = vcmask 15360
        %1670 = vst.msk [vmem:[%s598] sm:$0xff] %vm1669, %v1665
        %1671 = vst.msk [vmem:[%s598 + $0x8] sm:$0xff] %vm1669, %v1666
        %1672 = vst.msk [vmem:[%s598 + $0x10] sm:$0xff] %vm1669, %v1667
        %1673 = vst.msk [vmem:[%s598 + $0x18] sm:$0xff] %vm1669, %v1668
        %v1674 = vld [vmem:[%s554] sm:$0x1]
        %v1675 = vsel %vm1664, %v1382, %v1659
        %v1676 = vadd.f32 %v1674, %v1675
        %vm1677 = vcmask 8192
        %1678 = vst.msk [vmem:[%s554] sm:$0x1] %vm1677, %v1676
        // Predicated region
        $region80: #{grvq_forward.1} parent=70 // pred_check
          %p1679 = pneg %p601
        $region81: #{grvq_forward.1} parent=70 // pred_check_branch
          %1681 = sbr.rel (%p1679) target = $region83
        $region82: #{grvq_forward.1} parent=70 // pred_region
          %v1682 = vld [vmem:[%s554] sm:$0x1]
          %v1683 = vmul.f32 %v1682, 0.001953125
          %1684 = vst.msk [vmem:[%s554] sm:$0x1] %vm1677, %v1683
        $region83: #{grvq_forward.1} parent=70 // pred_fallthru
          _
        %v1685 = vpack.c.bf16 %v1661, %v1660
        %v1686 = vpack.c.bf16 %v1663, %v1662
        %v1687 = vld [vmem:[%s583] sm:$0xff]
        %v1688 = vld [vmem:[%s583 + $0x8] sm:$0xff]
        %v1689 = vld [vmem:[%s583 + $0x10] sm:$0xf]
        %v1690 = vld [vmem:[%s583 + $0x14] sm:$0xff]
        %v1691 = vld [vmem:[%s583 + $0x1c] sm:$0xff]
        %v1692 = vld [vmem:[%s583 + $0x24] sm:$0xf]
        %v1693 = vld [vmem:[%s587] sm:$0x1f]
        %v1695 = vlaneseq
        %v1696 = vshrl.u32 %v1695, 7
        %v1697 = vsub.s32 0, %v1696
        %v1698 = vrot.slane %v1693, %v1697
        %v1699 = vlaneseq
        %v1700 = vshrl.u32 %v1699, 7
        %v1701 = vsub.s32 1, %v1700
        %v1702 = vrot.slane %v1693, %v1701
        %v1703 = vlaneseq
        %v1704 = vshrl.u32 %v1703, 7
        %v1705 = vsub.s32 2, %v1704
        %v1706 = vrot.slane %v1693, %v1705
        %v1707 = vlaneseq
        %v1708 = vshrl.u32 %v1707, 7
        %v1709 = vsub.s32 3, %v1708
        %v1710 = vrot.slane %v1693, %v1709
        %v1711 = vlaneseq
        %v1712 = vshrl.u32 %v1711, 7
        %v1713 = vsub.s32 4, %v1712
        %v1714 = vrot.slane %v1693, %v1713
        %v1726 = vunpack.c.l.b16 %v1687
        %v1727 = vunpack.c.h.b16 %v1687
        %v1728 = vunpack.c.l.b16 %v1688
        %v1729 = vunpack.c.h.b16 %v1688
        %v1730 = vunpack.c.l.b16 %v1689
        %v1731 = vunpack.c.l.b16 %v1690
        %v1732 = vunpack.c.h.b16 %v1690
        %v1733 = vunpack.c.l.b16 %v1691
        %v1734 = vunpack.c.h.b16 %v1691
        %v1735 = vunpack.c.l.b16 %v1692
        %v1736 = vpack.c.b16 %v1731, %v1726
        %v1737 = vpack.c.b16 %v1732, %v1727
        %v1738 = vpack.c.b16 %v1733, %v1728
        %v1739 = vpack.c.b16 %v1734, %v1729
        %v1740 = vpack.c.b16 %v1735, %v1730
        %v1747 = vsel %vm1150, %v1685, 0
        %v1750 = vsel %vm1150, %v1686, 0
        %1752 = vmatprep.subr.bf16.mxu0 0
        %1753 = vmatpush1.bf16.msra.mxu0 0
        %1754 = vmatprep.subr.bf16.mxu0 0
        %1755 = vmatpush1.bf16.msra.mxu0 0
        %1756 = vmatprep.subr.bf16.mxu0 0
        %1757 = vmatpush1.bf16.msra.mxu0 0
        %1758 = vmatprep.subr.bf16.mxu0 0
        %1759 = vmatpush1.bf16.msra.mxu0 0
        %1760 = vmatprep.subr.bf16.mxu0 0
        %1761 = vmatpush1.bf16.msra.mxu0 0
        %1762 = vmatprep.subr.bf16.mxu0 0
        %1763 = vmatpush1.bf16.msra.mxu0 0
        %1764 = vmatprep.subr.bf16.mxu0 0
        %1765 = vmatpush1.bf16.msra.mxu0 0
        %1766 = vmatprep.subr.bf16.mxu0 %v1737
        %1767 = vmatpush1.bf16.msra.mxu0 %v1736
        %1768 = vmatprep.subr.bf16.mxu0 0
        %1769 = vmatpush2.bf16.msra.mxu0 0
        %1770 = vmatprep.subr.bf16.mxu0 0
        %1771 = vmatpush2.bf16.msra.mxu0 0
        %1772 = vmatprep.subr.bf16.mxu0 0
        %1773 = vmatpush2.bf16.msra.mxu0 0
        %1774 = vmatprep.subr.bf16.mxu0 0
        %1775 = vmatpush2.bf16.msra.mxu0 0
        %1776 = vmatprep.subr.bf16.mxu0 0
        %1777 = vmatpush2.bf16.msra.mxu0 0
        %1778 = vmatprep.subr.bf16.mxu0 0
        %1779 = vmatpush2.bf16.msra.mxu0 0
        %1780 = vmatprep.subr.bf16.mxu0 0
        %1781 = vmatpush2.bf16.msra.mxu0 0
        %1782 = vmatprep.subr.bf16.mxu0 0
        %1783 = vmatpush2.bf16.msra.mxu0 0
        %1784 = vmatprep.mubr.bf16.mxu0 0
        %1785 = vmatmul.mubr.bf16.gmra.mxu0 %v1747
        %v1786 = vpop.f32.mrf.mxu0
        %v1787 = vadd.f32 %v1698, %v1786
        %v1788 = vpop.f32.mrf.mxu0
        %v1789 = vadd.f32 %v1702, %v1788
        %v1790 = vpop.f32.mrf.mxu0
        %v1791 = vadd.f32 %v1698, %v1790
        %v1792 = vpop.f32.mrf.mxu0
        %v1793 = vadd.f32 %v1702, %v1792
        %1794 = vmatprep.mubr.bf16.mxu0 0
        %1795 = vmatmul.mubr.bf16.gmra.mxu0 %v1750
        %v1796 = vpop.f32.mrf.mxu0
        %v1797 = vadd.f32 %v1698, %v1796
        %v1798 = vpop.f32.mrf.mxu0
        %v1799 = vadd.f32 %v1702, %v1798
        %v1800 = vpop.f32.mrf.mxu0
        %v1801 = vadd.f32 %v1698, %v1800
        %v1802 = vpop.f32.mrf.mxu0
        %v1803 = vadd.f32 %v1702, %v1802
        %1804 = vdwg.mxu0
        %1805 = vmatprep.subr.bf16.mxu0 0
        %1806 = vmatpush1.bf16.msra.mxu0 0
        %1807 = vmatprep.subr.bf16.mxu0 0
        %1808 = vmatpush1.bf16.msra.mxu0 0
        %1809 = vmatprep.subr.bf16.mxu0 0
        %1810 = vmatpush1.bf16.msra.mxu0 0
        %1811 = vmatprep.subr.bf16.mxu0 0
        %1812 = vmatpush1.bf16.msra.mxu0 0
        %1813 = vmatprep.subr.bf16.mxu0 0
        %1814 = vmatpush1.bf16.msra.mxu0 0
        %1815 = vmatprep.subr.bf16.mxu0 0
        %1816 = vmatpush1.bf16.msra.mxu0 0
        %1817 = vmatprep.subr.bf16.mxu0 0
        %1818 = vmatpush1.bf16.msra.mxu0 0
        %1819 = vmatprep.subr.bf16.mxu0 %v1739
        %1820 = vmatpush1.bf16.msra.mxu0 %v1738
        %1821 = vmatprep.subr.bf16.mxu0 0
        %1822 = vmatpush2.bf16.msra.mxu0 0
        %1823 = vmatprep.subr.bf16.mxu0 0
        %1824 = vmatpush2.bf16.msra.mxu0 0
        %1825 = vmatprep.subr.bf16.mxu0 0
        %1826 = vmatpush2.bf16.msra.mxu0 0
        %1827 = vmatprep.subr.bf16.mxu0 0
        %1828 = vmatpush2.bf16.msra.mxu0 0
        %1829 = vmatprep.subr.bf16.mxu0 0
        %1830 = vmatpush2.bf16.msra.mxu0 0
        %1831 = vmatprep.subr.bf16.mxu0 0
        %1832 = vmatpush2.bf16.msra.mxu0 0
        %1833 = vmatprep.subr.bf16.mxu0 0
        %1834 = vmatpush2.bf16.msra.mxu0 0
        %1835 = vmatprep.subr.bf16.mxu0 0
        %1836 = vmatpush2.bf16.msra.mxu0 0
        %1837 = vmatprep.mubr.bf16.mxu0 0
        %1838 = vmatmul.mubr.bf16.gmra.mxu0 %v1747
        %v1839 = vpop.f32.mrf.mxu0
        %v1840 = vadd.f32 %v1706, %v1839
        %v1841 = vpop.f32.mrf.mxu0
        %v1842 = vadd.f32 %v1710, %v1841
        %v1843 = vpop.f32.mrf.mxu0
        %v1844 = vadd.f32 %v1706, %v1843
        %v1845 = vpop.f32.mrf.mxu0
        %v1846 = vadd.f32 %v1710, %v1845
        %1847 = vmatprep.mubr.bf16.mxu0 0
        %1848 = vmatmul.mubr.bf16.gmra.mxu0 %v1750
        %v1849 = vpop.f32.mrf.mxu0
        %v1850 = vadd.f32 %v1706, %v1849
        %v1851 = vpop.f32.mrf.mxu0
        %v1852 = vadd.f32 %v1710, %v1851
        %v1853 = vpop.f32.mrf.mxu0
        %v1854 = vadd.f32 %v1706, %v1853
        %v1855 = vpop.f32.mrf.mxu0
        %v1856 = vadd.f32 %v1710, %v1855
        %1857 = vdwg.mxu0
        %1858 = vmatprep.subr.bf16.mxu0 0
        %1859 = vmatpush1.bf16.msra.mxu0 0
        %1860 = vmatprep.subr.bf16.mxu0 0
        %1861 = vmatpush1.bf16.msra.mxu0 0
        %1862 = vmatprep.subr.bf16.mxu0 0
        %1863 = vmatpush1.bf16.msra.mxu0 0
        %1864 = vmatprep.subr.bf16.mxu0 0
        %1865 = vmatpush1.bf16.msra.mxu0 0
        %1866 = vmatprep.subr.bf16.mxu0 0
        %1867 = vmatpush1.bf16.msra.mxu0 0
        %1868 = vmatprep.subr.bf16.mxu0 0
        %1869 = vmatpush1.bf16.msra.mxu0 0
        %1870 = vmatprep.subr.bf16.mxu0 0
        %1871 = vmatpush1.bf16.msra.mxu0 0
        %1872 = vmatprep.subr.bf16.mxu0 0
        %1873 = vmatpush1.bf16.msra.mxu0 %v1740
        %1874 = vmatprep.subr.bf16.mxu0 0
        %1875 = vmatpush2.bf16.msra.mxu0 0
        %1876 = vmatprep.subr.bf16.mxu0 0
        %1877 = vmatpush2.bf16.msra.mxu0 0
        %1878 = vmatprep.subr.bf16.mxu0 0
        %1879 = vmatpush2.bf16.msra.mxu0 0
        %1880 = vmatprep.subr.bf16.mxu0 0
        %1881 = vmatpush2.bf16.msra.mxu0 0
        %1882 = vmatprep.subr.bf16.mxu0 0
        %1883 = vmatpush2.bf16.msra.mxu0 0
        %1884 = vmatprep.subr.bf16.mxu0 0
        %1885 = vmatpush2.bf16.msra.mxu0 0
        %1886 = vmatprep.subr.bf16.mxu0 0
        %1887 = vmatpush2.bf16.msra.mxu0 0
        %1888 = vmatprep.subr.bf16.mxu0 0
        %1889 = vmatpush2.bf16.msra.mxu0 0
        %1890 = vmatprep.mubr.bf16.mxu0 0
        %1891 = vmatmul.mubr.bf16.gmra.mxu0 %v1747
        %v1892 = vpop.f32.mrf.mxu0
        %v1893 = vadd.f32 %v1714, %v1892
        %v1894 = vpop.f32.mrf.mxu0
        %v1895 = vpop.f32.mrf.mxu0
        %v1896 = vadd.f32 %v1714, %v1895
        %v1897 = vpop.f32.mrf.mxu0
        %1898 = vmatprep.mubr.bf16.mxu0 0
        %1899 = vmatmul.mubr.bf16.gmra.mxu0 %v1750
        %v1900 = vpop.f32.mrf.mxu0
        %v1901 = vadd.f32 %v1714, %v1900
        %v1902 = vpop.f32.mrf.mxu0
        %v1903 = vpop.f32.mrf.mxu0
        %v1904 = vadd.f32 %v1714, %v1903
        %v1905 = vpop.f32.mrf.mxu0
        %1906 = vdwg.mxu0
        %1907 = vst [vmem:[%s537] sm:$0xff] %v1787
        %1908 = vst [vmem:[%s537 + $0x8] sm:$0xff] %v1789
        %1909 = vst [vmem:[%s537 + $0x10] sm:$0xff] %v1840
        %1910 = vst [vmem:[%s537 + $0x18] sm:$0xff] %v1842
        %1911 = vst [vmem:[%s537 + $0x20] sm:$0xff] %v1893
        %1912 = vst [vmem:[%s537 + $0x28] sm:$0xff] %v1791
        %1913 = vst [vmem:[%s537 + $0x30] sm:$0xff] %v1793
        %1914 = vst [vmem:[%s537 + $0x38] sm:$0xff] %v1844
        %1915 = vst [vmem:[%s537 + $0x40] sm:$0xff] %v1846
        %1916 = vst [vmem:[%s537 + $0x48] sm:$0xff] %v1896
        %1917 = vst [vmem:[%s537 + $0x50] sm:$0xff] %v1797
        %1918 = vst [vmem:[%s537 + $0x58] sm:$0xff] %v1799
        %1919 = vst [vmem:[%s537 + $0x60] sm:$0xff] %v1850
        %1920 = vst [vmem:[%s537 + $0x68] sm:$0xff] %v1852
        %1921 = vst [vmem:[%s537 + $0x70] sm:$0xff] %v1901
        %1922 = vst [vmem:[%s537 + $0x78] sm:$0xff] %v1801
        %1923 = vst [vmem:[%s537 + $0x80] sm:$0xff] %v1803
        %1924 = vst [vmem:[%s537 + $0x88] sm:$0xff] %v1854
        %1925 = vst [vmem:[%s537 + $0x90] sm:$0xff] %v1856
        %1926 = vst [vmem:[%s537 + $0x98] sm:$0xff] %v1904
        %s1927 = sand.u32 %s260, 1
        %s1928 = scalar_lea.sflag [#allocation4], %s1927
        %s1929 = sand.u32 %s260, 1
        %s1930 = smul.addr %s1929, 160
        %s1931 = scalar_lea.vmem [#allocation3], %s1930
        %s1932 = smul.u32 4, %s33
        %p1933 = scmp.lt.s32.totalorder %s32, 1
        %s1934 = scalar_select %p1933, %s32, 1
        %p1935 = scmp.lt.s32.totalorder %s1932, 3
        %s1936 = scalar_select %p1935, %s1932, 3
        %s1937 = smul.addr %s1934, 4
        %s1938 = sadd.s32 %s1936, %s1937
        %s1939 = smul.addr %s1938, 8
        %s1940 = scalar_lea.vmem %s9, %s1939
        %s1941 = sand.u32 %s314, 1
        %s1942 = scalar_lea.sflag [#allocation6], %s1941
        %s1943 = sand.u32 %s314, 1
        %s1944 = scalar_lea.vmem [#allocation5], %s1943
        // Predicated region
        $region84: #{grvq_forward.1} parent=70 // pred_check
          %p1945 = pneg %p270
        $region85: #{grvq_forward.1} parent=70 // pred_check_branch
          %1947 = sbr.rel (%p1945) target = $region87
        $region86: #{grvq_forward.1} parent=70 // pred_region
          %s1948 = smul.u32 4, %s33
          %s1949 = smul.u32 5, %s32
          %s1951 = ssub.s32 2560, 2560
          %1952 = vsyncadd %s1928, %s1951
          %s1953 = smul.addr %s1948, 10
          %s1954 = sadd.s32 %s1949, %s1953
          %s1955 = smul.addr %s1954, 128
          %s1956 = scalar_lea.hbm %s8, %s1955
          %s1957 = sshll.u32 %s1931, 4
          %s1958 = int_to_ptr.vmem [resolvable:$true] %s1957
          %1963 = dma.vmem_to_hbm [thread:$0]  %s1958, 2560, %s1956, %s1928, 640, 1280, 40
        $region87: #{grvq_forward.1} parent=70 // pred_fallthru
          _
        // Predicated region
        $region88: #{grvq_forward.1} parent=70 // pred_check
          %p1964 = pneg %p298
        $region89: #{grvq_forward.1} parent=70 // pred_check_branch
          %1966 = sbr.rel (%p1964) target = $region91
        $region90: #{grvq_forward.1} parent=70 // pred_region
          %s1967 = smul.u32 4, %s33
        $region91: #{grvq_forward.1} parent=70 // pred_fallthru
          _
        // Predicated region
        $region92: #{grvq_forward.1} parent=70 // pred_check
          %p1968 = pneg %p324
        $region93: #{grvq_forward.1} parent=70 // pred_check_branch
          %1970 = sbr.rel (%p1968) target = $region95
        $region94: #{grvq_forward.1} parent=70 // pred_region
          %s1972 = ssub.s32 16, 16
          %1973 = vsyncadd %s1942, %s1972
          %s1974 = smul.addr %s32, 16
          %s1975 = scalar_lea.hbm %s10, %s1974
          %s1977 = sshll.u32 %s1944, 4
          %s1978 = int_to_ptr.vmem [resolvable:$true] %s1977
          %1980 = dma.vmem_to_hbm [thread:$0]  %s1978, 16, %s1975, %s1942
        $region95: #{grvq_forward.1} parent=70 // pred_fallthru
          _
      $region71: #{grvq_forward.1} parent=5 // pred_fallthru
        _
      %p1981 = scmp.le.s32.totalorder 2, %s23
      // Predicated region
      $region96: #{grvq_forward.1} parent=5 // pred_check
        %p1982 = pneg %p1981
      $region97: #{grvq_forward.1} parent=5 // pred_check_branch
        %1984 = sbr.rel (%p1982) target = $region99
      $region98: #{grvq_forward.1} parent=5 // pred_region
        %s1985 = ssub.s32 %s23, 2
        // Predicated region
        $region100: #{grvq_forward.1} parent=98 // pred_check
          %p1986 = pneg %p276
        $region101: #{grvq_forward.1} parent=98 // pred_check_branch
          %1988 = sbr.rel (%p1986) target = $region103
        $region102: #{grvq_forward.1} parent=98 // pred_region
          %s1989 = sand.u32 %s261, 1
          %s1990 = scalar_lea.sflag [#allocation4], %s1989
          %s1991 = sand.u32 %s261, 1
          %s1992 = smul.addr %s1991, 160
          %s1993 = scalar_lea.vmem [#allocation3], %s1992
          %1994 = dma.done %s1990, 2560
        $region103: #{grvq_forward.1} parent=98 // pred_fallthru
          _
        // Predicated region
        $region104: #{grvq_forward.1} parent=98 // pred_check
          %p1995 = pneg %p304
        $region105: #{grvq_forward.1} parent=98 // pred_check_branch
          %1997 = sbr.rel (%p1995) target = $region107
        $region106: #{grvq_forward.1} parent=98 // pred_region
          %s1998 = smul.u32 4, %s35
          %p1999 = scmp.lt.s32.totalorder %s34, 1
          %s2000 = scalar_select %p1999, %s34, 1
          %p2001 = scmp.lt.s32.totalorder %s1998, 3
          %s2002 = scalar_select %p2001, %s1998, 3
          %s2003 = smul.addr %s2000, 4
          %s2004 = sadd.s32 %s2002, %s2003
          %s2005 = smul.addr %s2004, 8
          %s2006 = scalar_lea.vmem %s9, %s2005
        $region107: #{grvq_forward.1} parent=98 // pred_fallthru
          _
        // Predicated region
        $region108: #{grvq_forward.1} parent=98 // pred_check
          %p2007 = pneg %p330
        $region109: #{grvq_forward.1} parent=98 // pred_check_branch
          %2009 = sbr.rel (%p2007) target = $region111
        $region110: #{grvq_forward.1} parent=98 // pred_region
          %s2010 = sand.u32 %s315, 1
          %s2011 = scalar_lea.sflag [#allocation6], %s2010
          %s2012 = sand.u32 %s315, 1
          %s2013 = scalar_lea.vmem [#allocation5], %s2012
          %2014 = dma.done %s2011, 16
        $region111: #{grvq_forward.1} parent=98 // pred_fallthru
          _
      $region99: #{grvq_forward.1} parent=5 // pred_fallthru
        _
    $region6: #{grvq_forward.1} parent=1 // loop_footer
      %s27 = sadd.s32 1, %s23
    $region7: #{grvq_forward.1} parent=1 // loop_footer_branch
      %22 = sbr.rel target = $region3
    $region8: #{grvq_forward.1} parent=1 // loop_exit
      _
    %2015 = vsyncpa [#allocation4], 1
    %s2016 = scalar_lea.sflag [#allocation4], 1
    %2017 = vsyncpa %s2016, 1
    %2018 = vsyncpa [#allocation6], 1
    %s2019 = scalar_lea.sflag [#allocation6], 1
    %2020 = vsyncpa %s2019, 1

</llo_original>
